<compile_context>
chip_gen: v7x
topology: tpu7x:2x2x1
jax: 0.10.0
libtpu: 0.0.40
codegen_flags: <defaults>
</compile_context>

<pallas_src>
import functools
import math

import jax
import jax.numpy as jnp
from jax.experimental import pallas as pl
from jax.experimental.pallas import tpu as pltpu

VMEM_LIMIT_BYTES = 32 * 1024 * 1024  # well under v7x 64 MiB/core; actual use ~ few MiB


# --------------------------------------------------------------------------- #
# Linear projection kernel:  o = x @ w + b   (bf16 operands, f32 accumulation) #
# --------------------------------------------------------------------------- #
def _linear_kernel(x_ref, w_ref, b_ref, o_ref):
    acc = jnp.dot(x_ref[...], w_ref[...], preferred_element_type=jnp.float32)
    o_ref[...] = (acc + b_ref[...]).astype(o_ref.dtype)


def pallas_linear(x, w, b, *, out_dtype, tm=256):
    """x: [M, K], w: [K, N], b: [N] -> [M, N]."""
    M, K = x.shape
    _, N = w.shape
    tm = min(tm, M)
    assert M % tm == 0, (M, tm)
    b2 = b.reshape(1, N)
    return pl.pallas_call(
        _linear_kernel,
        out_shape=jax.ShapeDtypeStruct((M, N), out_dtype),
        grid=(M // tm,),
        in_specs=[
            pl.BlockSpec((tm, K), lambda i: (i, 0)),
            pl.BlockSpec((K, N), lambda i: (0, 0)),   # weights resident across steps
            pl.BlockSpec((1, N), lambda i: (0, 0)),
        ],
        out_specs=pl.BlockSpec((tm, N), lambda i: (i, 0)),
        compiler_params=pltpu.CompilerParams(
            dimension_semantics=("parallel",),
            vmem_limit_bytes=VMEM_LIMIT_BYTES,
        ),
    )(x, w, b2)


# --------------------------------------------------------------------------- #
# Flash-attention forward with causal mask (online softmax)                   #
# --------------------------------------------------------------------------- #
def _flash_mha_kernel(q_ref, k_ref, v_ref, o_ref, m_scr, l_scr, acc_scr, *, sm_scale):
    qi = pl.program_id(2)
    ki = pl.program_id(3)
    n_kv = pl.num_programs(3)
    tq, _dh = q_ref.shape          # blocks are 2-D (leading batch dim squeezed)
    tk = k_ref.shape[0]

    @pl.when(ki == 0)
    def _init():
        m_scr[...] = jnp.full(m_scr.shape, -jnp.inf, dtype=m_scr.dtype)
        l_scr[...] = jnp.zeros_like(l_scr)
        acc_scr[...] = jnp.zeros_like(acc_scr)

    def _online_softmax_update(s):
        m_prev = m_scr[...]
        m_new = jnp.maximum(m_prev, s.max(axis=-1, keepdims=True))
        alpha = jnp.exp(m_prev - m_new)
        p = jnp.exp(s - m_new)
        l_scr[...] = alpha * l_scr[...] + p.sum(axis=-1, keepdims=True)
        acc_scr[...] = alpha * acc_scr[...] + jnp.dot(
            p.astype(v_ref.dtype), v_ref[...], preferred_element_type=jnp.float32)
        m_scr[...] = m_new

    def _scores():
        # Fold sm_scale into q (tq*Dh mults instead of tq*tk).
        q = q_ref[...] * sm_scale                     # bf16 (tq, Dh)
        return jax.lax.dot_general(                   # (tq, tk) f32 on the MXU
            q, k_ref[...], (((1,), (1,)), ((), ())),
            preferred_element_type=jnp.float32)

    # Interior tiles (fully below the diagonal): no mask work at all.
    @pl.when((ki + 1) * tk <= qi * tq)
    def _interior():
        _online_softmax_update(_scores())

    # Diagonal-crossing tiles: build the iota-based causal mask.
    @pl.when(jnp.logical_and(ki * tk < (qi + 1) * tq, (ki + 1) * tk > qi * tq))
    def _diagonal():
        s = _scores()
        q_pos = qi * tq + jax.lax.broadcasted_iota(jnp.int32, (tq, tk), 0)
        k_pos = ki * tk + jax.lax.broadcasted_iota(jnp.int32, (tq, tk), 1)
        _online_softmax_update(jnp.where(q_pos >= k_pos, s, -jnp.inf))

    # Tiles strictly above the diagonal are skipped entirely (no branch taken);
    # their K/V DMAs are also suppressed by the clamped index_maps below.

    @pl.when(ki == n_kv - 1)
    def _finalize():
        inv_l = pl.reciprocal(l_scr[...], approx=True)   # EUP slot, ~free
        o_ref[...] = (acc_scr[...] * inv_l).astype(o_ref.dtype)


def pallas_causal_mha(qkv, *, num_heads, head_dim, sm_scale, tq=256, tk=256):
    """qkv: [B, S, 3*H*Dh] bf16 (columns ordered q_h0..q_hH-1 | k_h0.. | v_h0..)
       -> [B, S, H*Dh] bf16 (columns ordered by head), causal attention."""
    B, S, threeD = qkv.shape
    H, Dh = num_heads, head_dim
    assert threeD == 3 * H * Dh
    tq = min(tq, S)
    tk = min(tk, S)
    assert S % tq == 0 and S % tk == 0, (S, tq, tk)

    def q_map(b, h, i, j):
        return (b, i, h)

    def _kv_block(i, j):
        # Clamp to the last causally-needed kv block for q tile i so skipped
        # (above-diagonal) steps re-request the previous block -> no DMA issued.
        return jnp.minimum(j, ((i + 1) * tq - 1) // tk)

    def k_map(b, h, i, j):
        return (b, _kv_block(i, j), H + h)

    def v_map(b, h, i, j):
        return (b, _kv_block(i, j), 2 * H + h)

    def o_map(b, h, i, j):
        return (b, i, h)

    kernel = functools.partial(_flash_mha_kernel, sm_scale=sm_scale)
    return pl.pallas_call(
        kernel,
        out_shape=jax.ShapeDtypeStruct((B, S, H * Dh), qkv.dtype),
        grid=(B, H, S // tq, S // tk),
        in_specs=[
            pl.BlockSpec((None, tq, Dh), q_map),   # leading dim squeezed -> 2-D refs
            pl.BlockSpec((None, tk, Dh), k_map),
            pl.BlockSpec((None, tk, Dh), v_map),
        ],
        out_specs=pl.BlockSpec((None, tq, Dh), o_map),
        scratch_shapes=[
            pltpu.VMEM((tq, 1), jnp.float32),    # m (running max)
            pltpu.VMEM((tq, 1), jnp.float32),    # l (running denom)
            pltpu.VMEM((tq, Dh), jnp.float32),   # acc (running numerator)
        ],
        compiler_params=pltpu.CompilerParams(
            dimension_semantics=("parallel", "parallel", "parallel", "arbitrary"),
            vmem_limit_bytes=VMEM_LIMIT_BYTES,
        ),
    )(qkv, qkv, qkv)


# --------------------------------------------------------------------------- #
# Module wrapper + pure-JAX reference                                          #
# --------------------------------------------------------------------------- #
class MaskedMultiHeadAttention:
    """Causal masked multi-head self-attention built on the Pallas kernels above."""

    def __init__(self, d_model=256, num_heads=2, key=None):
        assert d_model % num_heads == 0
        assert (d_model // num_heads) % 128 == 0, "head_dim must be lane-dense (x128)"
        self.d_model = d_model
        self.num_heads = num_heads
        if key is None:
            key = jax.random.PRNGKey(0)
        k1, k2, k3, k4 = jax.random.split(key, 4)
        scale = 1.0 / math.sqrt(d_model)
        self.w_qkv = (jax.random.normal(k1, (d_model, 3 * d_model), jnp.float32)
                      * scale).astype(jnp.bfloat16)
        self.b_qkv = (jax.random.normal(k2, (3 * d_model,), jnp.float32)
                      * 0.01).astype(jnp.bfloat16)
        self.w_o = (jax.random.normal(k3, (d_model, d_model), jnp.float32)
                    * scale).astype(jnp.bfloat16)
        self.b_o = (jax.random.normal(k4, (d_model,), jnp.float32)
                    * 0.01).astype(jnp.bfloat16)

    def forward(self, x):
        B, S, D = x.shape
        H = self.num_heads
        Dh = D // H

        xb = x.astype(jnp.bfloat16).reshape(B * S, D)
        # Fused QKV projection; columns are [q_h0..q_hH-1 | k_h0.. | v_h0..].
        qkv = pallas_linear(xb, self.w_qkv, self.b_qkv, out_dtype=jnp.bfloat16)
        qkv = qkv.reshape(B, S, 3 * D)                  # free reshape, no transpose

        # Attention reads heads directly via BlockSpec column indices; output lands
        # already head-merged as (B, S, D) — no XLA transposes around the kernel.
        o = pallas_causal_mha(qkv, num_heads=H, head_dim=Dh,
                              sm_scale=1.0 / math.sqrt(Dh))

        # TODO(synk): at this tiny model size the QKV proj + attention (+ out proj)
        # could be fused into a single pallas_call to remove the remaining HBM
        # round trips; kept as three calls for clarity.
        out = pallas_linear(o.reshape(B * S, D), self.w_o, self.b_o,
                            out_dtype=jnp.float32)
        return out.reshape(B, S, D)

    __call__ = forward


def mha_reference(x, w_qkv, b_qkv, w_o, b_o, num_heads):
    """Pure-JAX reference following the same bf16-operand / f32-accumulate path."""
    B, S, D = x.shape
    Dh = D // num_heads
    xb = x.astype(jnp.bfloat16)
    qkv = (jnp.einsum("bsd,de->bse", xb, w_qkv, preferred_element_type=jnp.float32)
           + b_qkv.astype(jnp.float32)).astype(jnp.bfloat16)
    qkv = qkv.reshape(B, S, 3, num_heads, Dh)
    q = qkv[:, :, 0].transpose(0, 2, 1, 3)
    k = qkv[:, :, 1].transpose(0, 2, 1, 3)
    v = qkv[:, :, 2].transpose(0, 2, 1, 3)
    s = jnp.einsum("bhqd,bhkd->bhqk", q, k,
                   preferred_element_type=jnp.float32) / math.sqrt(Dh)
    causal = jnp.tril(jnp.ones((S, S), dtype=bool))
    s = jnp.where(causal[None, None], s, -jnp.inf)
    p = jax.nn.softmax(s, axis=-1).astype(jnp.bfloat16)
    o = jnp.einsum("bhqk,bhkd->bhqd", p, v, preferred_element_type=jnp.float32)
    o = o.astype(jnp.bfloat16).transpose(0, 2, 1, 3).reshape(B, S, D)
    out = (jnp.einsum("bsd,de->bse", o, w_o, preferred_element_type=jnp.float32)
           + b_o.astype(jnp.float32))
    return out


if __name__ == "__main__":
    # Deterministic example. head_dim=128 (lane-dense); S=512 with 256x256 tiles
    # exercises interior (unmasked), diagonal (masked) and skipped kv tiles.
    B, S, D, H = 2, 512, 256, 2
    key = jax.random.PRNGKey(0)
    kx, kp = jax.random.split(key)
    x = jax.random.normal(kx, (B, S, D), dtype=jnp.float32)

    mha = MaskedMultiHeadAttention(d_model=D, num_heads=H, key=kp)
    out = mha(x)
    jax.block_until_ready(out)

    assert out.shape == (B, S, D) and out.dtype == jnp.float32

    ref = mha_reference(x, mha.w_qkv, mha.b_qkv, mha.w_o, mha.b_o, H)
    max_err = float(jnp.max(jnp.abs(out - ref)))
    assert jnp.allclose(out, ref, atol=2e-2, rtol=2e-2), f"max_err={max_err}"

    print("KERNEL_OK")
</pallas_src>

<mosaic_0001>
module attributes {stable_mosaic.version = 11 : i64} {
  func.func @_linear_kernel(%arg0: i32, %arg1: memref<256x256xbf16, #tpu.memory_space<vmem>>, %arg2: memref<256x768xbf16, #tpu.memory_space<vmem>>, %arg3: memref<1x768xbf16, #tpu.memory_space<vmem>>, %arg4: memref<256x768xbf16, #tpu.memory_space<vmem>>) attributes {dimension_semantics = [#tpu.dimension_semantics<parallel>], iteration_bounds = array<i64: 4>, scalar_prefetch = 0 : i64, scratch_operands = 0 : i64, tpu.core_type = #tpu.core_type<tc>, window_params = [{transform_indices = @transform_0, window_bounds = array<i64: 256, 256>}, {pipeline_mode = #tpu.pipeline_mode<synchronous>, transform_indices = @transform_1, window_bounds = array<i64: 256, 768>}, {pipeline_mode = #tpu.pipeline_mode<synchronous>, transform_indices = @transform_2, window_bounds = array<i64: 1, 768>}, {transform_indices = @transform_3, window_bounds = array<i64: 256, 768>}]} {
    %c0 = arith.constant 0 : index
    %c0_0 = arith.constant 0 : index
    %0 = vector.load %arg1[%c0, %c0_0] : memref<256x256xbf16, #tpu.memory_space<vmem>>, vector<256x256xbf16>
    %c0_1 = arith.constant 0 : index
    %c0_2 = arith.constant 0 : index
    %1 = vector.load %arg2[%c0_1, %c0_2] : memref<256x768xbf16, #tpu.memory_space<vmem>>, vector<256x768xbf16>
    %cst = arith.constant dense<0.000000e+00> : vector<256x768xf32>
    %2 = tpu.matmul %0, %1, %cst {dimension_numbers = #tpu.dot_dimension_numbers<[1], [0], [0], [1], [0, 0, 1, 1], [], []>} : vector<256x256xbf16>, vector<256x768xbf16>, vector<256x768xf32> -> vector<256x768xf32>
    %c0_3 = arith.constant 0 : index
    %c0_4 = arith.constant 0 : index
    %3 = vector.load %arg3[%c0_3, %c0_4] : memref<1x768xbf16, #tpu.memory_space<vmem>>, vector<1x768xbf16>
    %4 = arith.extf %3 : vector<1x768xbf16> to vector<1x768xf32>
    %5 = vector.broadcast %4 : vector<1x768xf32> to vector<256x768xf32>
    %6 = arith.addf %2, %5 : vector<256x768xf32>
    %7 = arith.truncf %6 : vector<256x768xf32> to vector<256x768xbf16>
    %c0_5 = arith.constant 0 : index
    %c0_6 = arith.constant 0 : index
    %8 = vector.load %arg4[%c0_5, %c0_6] : memref<256x768xbf16, #tpu.memory_space<vmem>>, vector<256x768xbf16>
    tpu.vector_store %arg4[%c0_5, %c0_6], %7 {strides = array<i32>} : memref<256x768xbf16, #tpu.memory_space<vmem>>, vector<256x768xbf16>,
    return
  }
  func.func @transform_0(%arg0: i32) -> (i32, i32) {
    %c0_i32 = arith.constant 0 : i32
    %c0_i32_0 = arith.constant 0 : i32
    return %arg0, %c0_i32 : i32, i32
  }
  func.func @transform_1(%arg0: i32) -> (i32, i32) {
    %c0_i32 = arith.constant 0 : i32
    %c0_i32_0 = arith.constant 0 : i32
    %c0_i32_1 = arith.constant 0 : i32
    return %c0_i32, %c0_i32_0 : i32, i32
  }
  func.func @transform_2(%arg0: i32) -> (i32, i32) {
    %c0_i32 = arith.constant 0 : i32
    %c0_i32_0 = arith.constant 0 : i32
    %c0_i32_1 = arith.constant 0 : i32
    return %c0_i32, %c0_i32_0 : i32, i32
  }
  func.func @transform_3(%arg0: i32) -> (i32, i32) {
    %c0_i32 = arith.constant 0 : i32
    %c0_i32_0 = arith.constant 0 : i32
    return %arg0, %c0_i32 : i32, i32
  }
}

</mosaic_0001>

<llo_original>
// kernel: tpu_custom_call.1
$region0: #{tpu_custom_call.1}
  #allocation0 [shape = 'u32[]', space=smem, size = 0x4, offset = 0x4, fixed_abs, tag = 'smem constant byte address 0x4 - core index']
  #allocation1 [shape = 'u32[144,128]{1,0:T(1,128)}', space=vmem, size = 0x12000, scoped, tag = 'internal scratch']
  %s0 = inlined_call_operand.hbm [shape: bf16[1024,256], index: 0, kind: input, shape index: {}]
  %s1 = inlined_call_operand.hbm [shape: bf16[256,768], index: 1, kind: input, shape index: {}]
  %s2 = inlined_call_operand.hbm [shape: bf16[1,768], index: 2, kind: input, shape index: {}]
  %s3 = inlined_call_operand.hbm [shape: bf16[1024,768], index: 3, kind: output, shape index: {}]
  %s4 = sld [smem:[#allocation0]]
  $region57: #{tpu_custom_call.1} parent=0
    _
  %s6 = ssub.s32 1, %s4
  %s7 = scalar_select 0, %s6, %s4
  $region1: #{tpu_custom_call.1} parent=0
    #allocation2 [shape = 'u8[262144]{0}', space=vmem, size = 0x40000, scoped, tag = 'input window, operand 0']
    #allocation3 [shape = 's32[2]{0}', space=sflag, size = 0x8, scoped, tag = 'scoped memory for tpu_custom_call.1']
    #allocation4 [shape = 's32[2]{0}', space=sflag, size = 0x8, scoped, tag = 'scoped memory for tpu_custom_call.1']
    #allocation5 [shape = 'u8[393216]{0}', space=vmem, size = 0x60000, scoped, tag = 'input window, operand 1, single buffered']
    #allocation6 [shape = 's32[1]{0}', space=sflag, size = 0x4, scoped, tag = 'scoped memory for tpu_custom_call.1']
    #allocation7 [shape = 'u8[3072]{0}', space=vmem, size = 0xc00, scoped, tag = 'input window, operand 2, single buffered']
    #allocation8 [shape = 'u8[786432]{0}', space=vmem, size = 0xc0000, scoped, tag = 'output window, operand 0']
    %8 = vsyncpa [#allocation3], 0
    %s9 = scalar_lea.sflag [#allocation3], 1
    %10 = vsyncpa %s9, 0
    %11 = vsyncpa [#allocation6], 0
    %12 = vsyncpa [#allocation4], 0
    %s13 = scalar_lea.sflag [#allocation4], 1
    %14 = vsyncpa %s13, 0
    loop: start=0, step=1, limit=6
    $region2: #{tpu_custom_call.1} parent=1 // loop_pre_header
      _
    $region3: #{tpu_custom_call.1} parent=1 // loop_header
      %s16 = sphi 0, %s20
      %p17 = scmp.ge.s32.totalorder %s16, 6
      %s26 = sphi 0, %s28
      %s29 = sphi 0, %s26
      %s30 = sphi 0, %s29
      %s46 = sphi 0, %s30
      %s50 = sphi 0, %s50
      %s52 = sphi 0, %s50
      %s53 = sphi 0, %s52
      %s67 = sphi 0, %s53
      %s71 = sphi 0, %s71
      %s73 = sphi 0, %s71
      %s74 = sphi 0, %s73
      %s88 = sphi 0, %s74
      %s94 = sphi 0, %s96
      %s97 = sphi 0, %s94
      %s98 = sphi 0, %s97
      %s114 = sphi 0, %s98
    $region4: #{tpu_custom_call.1} parent=1 // loop_header_branch
      %19 = sbr.rel (%p17) target = $region8
    $region5: #{tpu_custom_call.1} parent=1 // loop_body
      %s21 = ssub.s32 %s16, 1
      %s22 = ssub.s32 %s16, 2
      %s23 = sadd.s32 %s16, 1
      %s24 = ssub.s32 %s16, %s23
      %p25 = scmp.eq.s32.totalorder %s24, 0
      %s27 = sadd.s32 %s26, 1
      %s28 = scalar_select %p25, %s26, %s27
      %p31 = pneg %p25
      %p32 = scmp.eq.s32.totalorder %s16, 3
      %p33 = por %p31, %p32
      %p34 = scmp.ne.s32.totalorder %s26, %s29
      %p35 = scmp.eq.s32.totalorder %s16, 0
      %p36 = por %p34, %p35
      %p37 = scmp.ne.s32.totalorder %s26, %s29
      %p38 = scmp.eq.s32.totalorder %s21, 3
      %p39 = por %p37, %p38
      %p40 = scmp.ne.s32.totalorder %s29, %s30
      %p41 = scmp.eq.s32.totalorder %s21, 0
      %p42 = por %p40, %p41
      %p43 = scmp.ne.s32.totalorder %s29, %s30
      %p44 = scmp.eq.s32.totalorder %s22, 3
      %p45 = por %p43, %p44
      %p47 = scmp.ne.s32.totalorder %s30, %s46
      %p48 = scmp.eq.s32.totalorder %s22, 0
      %p49 = por %p47, %p48
      %s51 = sadd.s32 %s50, 1
      %p54 = scmp.eq.s32.totalorder %s16, 3
      %p55 = scmp.ne.s32.totalorder %s50, %s52
      %p56 = scmp.eq.s32.totalorder %s16, 0
      %p57 = por %p55, %p56
      %p58 = scmp.ne.s32.totalorder %s50, %s52
      %p59 = scmp.eq.s32.totalorder %s21, 3
      %p60 = por %p58, %p59
      %p61 = scmp.ne.s32.totalorder %s52, %s53
      %p62 = scmp.eq.s32.totalorder %s21, 0
      %p63 = por %p61, %p62
      %p64 = scmp.ne.s32.totalorder %s52, %s53
      %p65 = scmp.eq.s32.totalorder %s22, 3
      %p66 = por %p64, %p65
      %p68 = scmp.ne.s32.totalorder %s53, %s67
      %p69 = scmp.eq.s32.totalorder %s22, 0
      %p70 = por %p68, %p69
      %s72 = sadd.s32 %s71, 1
      %p75 = scmp.eq.s32.totalorder %s16, 3
      %p76 = scmp.ne.s32.totalorder %s71, %s73
      %p77 = scmp.eq.s32.totalorder %s16, 0
      %p78 = por %p76, %p77
      %p79 = scmp.ne.s32.totalorder %s71, %s73
      %p80 = scmp.eq.s32.totalorder %s21, 3
      %p81 = por %p79, %p80
      %p82 = scmp.ne.s32.totalorder %s73, %s74
      %p83 = scmp.eq.s32.totalorder %s21, 0
      %p84 = por %p82, %p83
      %p85 = scmp.ne.s32.totalorder %s73, %s74
      %p86 = scmp.eq.s32.totalorder %s22, 3
      %p87 = por %p85, %p86
      %p89 = scmp.ne.s32.totalorder %s74, %s88
      %p90 = scmp.eq.s32.totalorder %s22, 0
      %p91 = por %p89, %p90
      %s92 = ssub.s32 %s16, %s23
      %p93 = scmp.eq.s32.totalorder %s92, 0
      %s95 = sadd.s32 %s94, 1
      %s96 = scalar_select %p93, %s94, %s95
      %p99 = pneg %p93
      %p100 = scmp.eq.s32.totalorder %s16, 3
      %p101 = por %p99, %p100
      %p102 = scmp.ne.s32.totalorder %s94, %s97
      %p103 = scmp.eq.s32.totalorder %s16, 0
      %p104 = por %p102, %p103
      %p105 = scmp.ne.s32.totalorder %s94, %s97
      %p106 = scmp.eq.s32.totalorder %s21, 3
      %p107 = por %p105, %p106
      %p108 = scmp.ne.s32.totalorder %s97, %s98
      %p109 = scmp.eq.s32.totalorder %s21, 0
      %p110 = por %p108, %p109
      %p111 = scmp.ne.s32.totalorder %s97, %s98
      %p112 = scmp.eq.s32.totalorder %s22, 3
      %p113 = por %p111, %p112
      %p115 = scmp.ne.s32.totalorder %s98, %s114
      %p116 = scmp.eq.s32.totalorder %s22, 0
      %p117 = por %p115, %p116
      %p118 = scmp.le.s32.totalorder 1, %s16
      %p119 = scmp.lt.s32.totalorder %s16, 5
      %p120 = pnand %p118, %p119
      %p121 = pneg %p120
      // Predicated region
      $region9: #{tpu_custom_call.1} parent=5 // pred_check
        _
      $region10: #{tpu_custom_call.1} parent=5 // pred_check_branch
        %123 = sbr.rel (%p120) target = $region12
      $region11: #{tpu_custom_call.1} parent=5 // pred_region
        %s124 = ssub.s32 %s16, 1
        // Predicated region
        $region13: #{tpu_custom_call.1} parent=11 // pred_check
          %p125 = pneg %p63
        $region14: #{tpu_custom_call.1} parent=11 // pred_check_branch
          %127 = sbr.rel (%p125) target = $region16
        $region15: #{tpu_custom_call.1} parent=11 // pred_region
          %s129 = ssub.s32 12288, 12288
          %130 = vsyncadd [#allocation6], %s129
          %s131 = sshll.u32 [#allocation5], 4
          %s132 = int_to_ptr.vmem [resolvable:$true] %s131
          %137 = dma.hbm_to_vmem [thread:$0]  %s1, 12288, %s132, [#allocation6], 384, 384, 24
        $region16: #{tpu_custom_call.1} parent=11 // pred_fallthru
          _
        // Predicated region
        $region17: #{tpu_custom_call.1} parent=11 // pred_check
          %p138 = pneg %p84
        $region18: #{tpu_custom_call.1} parent=11 // pred_check_branch
          %140 = sbr.rel (%p138) target = $region20
        $region19: #{tpu_custom_call.1} parent=11 // pred_region
          %s142 = ssub.s32 96, 96
          %143 = vsyncadd [#allocation6], %s142
          %s145 = sshll.u32 [#allocation7], 4
          %s146 = int_to_ptr.vmem [resolvable:$true] %s145
          %148 = dma.hbm_to_vmem [thread:$0]  %s2, 96, %s146, [#allocation6]
        $region20: #{tpu_custom_call.1} parent=11 // pred_fallthru
          _
      $region12: #{tpu_custom_call.1} parent=5 // pred_fallthru
        _
      %p149 = scmp.lt.s32.totalorder %s16, 4
      // Predicated region
      $region21: #{tpu_custom_call.1} parent=5 // pred_check
        %p150 = pneg %p149
      $region22: #{tpu_custom_call.1} parent=5 // pred_check_branch
        %152 = sbr.rel (%p150) target = $region24
      $region23: #{tpu_custom_call.1} parent=5 // pred_region
        // Predicated region
        $region25: #{tpu_custom_call.1} parent=23 // pred_check
          %p153 = pneg %p36
        $region26: #{tpu_custom_call.1} parent=23 // pred_check_branch
          %155 = sbr.rel (%p153) target = $region28
        $region27: #{tpu_custom_call.1} parent=23 // pred_region
          %s156 = sand.u32 %s26, 1
          %s157 = scalar_lea.sflag [#allocation3], %s156
          %s158 = sand.u32 %s26, 1
          %s159 = smul.addr %s158, 256
          %s160 = scalar_lea.vmem [#allocation2], %s159
          %s161 = smul.u32 32, %s16
          %s163 = ssub.s32 4096, 4096
          %164 = vsyncadd %s157, %s163
          %s165 = smul.addr %s161, 2
          %s166 = smul.addr %s165, 64
          %s167 = scalar_lea.hbm %s0, %s166
          %s168 = sshll.u32 %s160, 4
          %s169 = int_to_ptr.vmem [resolvable:$true] %s168
          %174 = dma.hbm_to_vmem [thread:$0]  %s167, 4096, %s169, %s157, 128, 128, 8
        $region28: #{tpu_custom_call.1} parent=23 // pred_fallthru
          _
      $region24: #{tpu_custom_call.1} parent=5 // pred_fallthru
        _
      %p175 = scmp.le.s32.totalorder 1, %s16
      %p176 = scmp.lt.s32.totalorder %s16, 5
      %p177 = pnand %p175, %p176
      %p178 = pneg %p177
      // Predicated region
      $region29: #{tpu_custom_call.1} parent=5 // pred_check
        _
      $region30: #{tpu_custom_call.1} parent=5 // pred_check_branch
        %180 = sbr.rel (%p177) target = $region32
      $region31: #{tpu_custom_call.1} parent=5 // pred_region
        %s181 = ssub.s32 %s16, 1
        %s182 = sand.u32 %s29, 1
        %s183 = scalar_lea.sflag [#allocation3], %s182
        %s184 = sand.u32 %s29, 1
        %s185 = smul.addr %s184, 256
        %s186 = scalar_lea.vmem [#allocation2], %s185
        // Predicated region
        $region33: #{tpu_custom_call.1} parent=31 // pred_check
          %p187 = pneg %p42
        $region34: #{tpu_custom_call.1} parent=31 // pred_check_branch
          %189 = sbr.rel (%p187) target = $region36
        $region35: #{tpu_custom_call.1} parent=31 // pred_region
          %190 = dma.done %s183, 4096
        $region36: #{tpu_custom_call.1} parent=31 // pred_fallthru
          _
        // Predicated region
        $region37: #{tpu_custom_call.1} parent=31 // pred_check
          %p191 = pneg %p63
        $region38: #{tpu_custom_call.1} parent=31 // pred_check_branch
          %193 = sbr.rel (%p191) target = $region40
        $region39: #{tpu_custom_call.1} parent=31 // pred_region
          %194 = dma.done [#allocation6], 12288
        $region40: #{tpu_custom_call.1} parent=31 // pred_fallthru
          _
        // Predicated region
        $region41: #{tpu_custom_call.1} parent=31 // pred_check
          %p195 = pneg %p84
        $region42: #{tpu_custom_call.1} parent=31 // pred_check_branch
          %197 = sbr.rel (%p195) target = $region44
        $region43: #{tpu_custom_call.1} parent=31 // pred_region
          %198 = dma.done [#allocation6], 96
        $region44: #{tpu_custom_call.1} parent=31 // pred_fallthru
          _
        %s199 = sand.u32 %s29, 1
        %s200 = scalar_lea.sflag [#allocation3], %s199
        %s201 = sand.u32 %s29, 1
        %s202 = smul.addr %s201, 256
        %s203 = scalar_lea.vmem [#allocation2], %s202
        %p204 = pneg %p42
        %p205 = pneg %p39
        %p206 = pneg %p63
        %p207 = pneg %p60
        %p208 = pneg %p84
        %p209 = pneg %p81
        %p210 = pneg %p110
        %p211 = pneg %p107
        %s212 = sand.u32 %s97, 1
        %s213 = scalar_lea.sflag [#allocation4], %s212
        %s214 = sand.u32 %s97, 1
        %s215 = smul.addr %s214, 768
        %s216 = scalar_lea.vmem [#allocation8], %s215
        %s217 = smul.u32 32, %s21
        %s218 = smul.u32 32, %s21
        %v219 = vld [vmem:[%s186] sm:$0xff]
        %v220 = vld [vmem:[%s186 + $0x8] sm:$0xff]
        %v221 = vld [vmem:[%s186 + $0x10] sm:$0xff]
        %v222 = vld [vmem:[%s186 + $0x18] sm:$0xff]
        %v223 = vld [vmem:[%s186 + $0x20] sm:$0xff]
        %v224 = vld [vmem:[%s186 + $0x28] sm:$0xff]
        %v225 = vld [vmem:[%s186 + $0x30] sm:$0xff]
        %v226 = vld [vmem:[%s186 + $0x38] sm:$0xff]
        %v227 = vld [vmem:[%s186 + $0x40] sm:$0xff]
        %v228 = vld [vmem:[%s186 + $0x48] sm:$0xff]
        %v229 = vld [vmem:[%s186 + $0x50] sm:$0xff]
        %v230 = vld [vmem:[%s186 + $0x58] sm:$0xff]
        %v231 = vld [vmem:[%s186 + $0x60] sm:$0xff]
        %v232 = vld [vmem:[%s186 + $0x68] sm:$0xff]
        %v233 = vld [vmem:[%s186 + $0x70] sm:$0xff]
        %v234 = vld [vmem:[%s186 + $0x78] sm:$0xff]
        %v235 = vld [vmem:[%s186 + $0x80] sm:$0xff]
        %v236 = vld [vmem:[%s186 + $0x88] sm:$0xff]
        %v237 = vld [vmem:[%s186 + $0x90] sm:$0xff]
        %v238 = vld [vmem:[%s186 + $0x98] sm:$0xff]
        %v239 = vld [vmem:[%s186 + $0xa0] sm:$0xff]
        %v240 = vld [vmem:[%s186 + $0xa8] sm:$0xff]
        %v241 = vld [vmem:[%s186 + $0xb0] sm:$0xff]
        %v242 = vld [vmem:[%s186 + $0xb8] sm:$0xff]
        %v243 = vld [vmem:[%s186 + $0xc0] sm:$0xff]
        %v244 = vld [vmem:[%s186 + $0xc8] sm:$0xff]
        %v245 = vld [vmem:[%s186 + $0xd0] sm:$0xff]
        %v246 = vld [vmem:[%s186 + $0xd8] sm:$0xff]
        %v247 = vld [vmem:[%s186 + $0xe0] sm:$0xff]
        %v248 = vld [vmem:[%s186 + $0xe8] sm:$0xff]
        %v249 = vld [vmem:[%s186 + $0xf0] sm:$0xff]
        %v250 = vld [vmem:[%s186 + $0xf8] sm:$0xff]
        %v251 = vld [vmem:[#allocation5] sm:$0xff]
        %v252 = vld [vmem:[#allocation5 + $0x8] sm:$0xff]
        %v253 = vld [vmem:[#allocation5 + $0x10] sm:$0xff]
        %v254 = vld [vmem:[#allocation5 + $0x18] sm:$0xff]
        %v255 = vld [vmem:[#allocation5 + $0x20] sm:$0xff]
        %v256 = vld [vmem:[#allocation5 + $0x28] sm:$0xff]
        %v257 = vld [vmem:[#allocation5 + $0x30] sm:$0xff]
        %v258 = vld [vmem:[#allocation5 + $0x38] sm:$0xff]
        %v259 = vld [vmem:[#allocation5 + $0x40] sm:$0xff]
        %v260 = vld [vmem:[#allocation5 + $0x48] sm:$0xff]
        %v261 = vld [vmem:[#allocation5 + $0x50] sm:$0xff]
        %v262 = vld [vmem:[#allocation5 + $0x58] sm:$0xff]
        %v263 = vld [vmem:[#allocation5 + $0x60] sm:$0xff]
        %v264 = vld [vmem:[#allocation5 + $0x68] sm:$0xff]
        %v265 = vld [vmem:[#allocation5 + $0x70] sm:$0xff]
        %v266 = vld [vmem:[#allocation5 + $0x78] sm:$0xff]
        %v267 = vld [vmem:[#allocation5 + $0x80] sm:$0xff]
        %v268 = vld [vmem:[#allocation5 + $0x88] sm:$0xff]
        %v269 = vld [vmem:[#allocation5 + $0x90] sm:$0xff]
        %v270 = vld [vmem:[#allocation5 + $0x98] sm:$0xff]
        %v271 = vld [vmem:[#allocation5 + $0xa0] sm:$0xff]
        %v272 = vld [vmem:[#allocation5 + $0xa8] sm:$0xff]
        %v273 = vld [vmem:[#allocation5 + $0xb0] sm:$0xff]
        %v274 = vld [vmem:[#allocation5 + $0xb8] sm:$0xff]
        %v275 = vld [vmem:[#allocation5 + $0xc0] sm:$0xff]
        %v276 = vld [vmem:[#allocation5 + $0xc8] sm:$0xff]
        %v277 = vld [vmem:[#allocation5 + $0xd0] sm:$0xff]
        %v278 = vld [vmem:[#allocation5 + $0xd8] sm:$0xff]
        %v279 = vld [vmem:[#allocation5 + $0xe0] sm:$0xff]
        %v280 = vld [vmem:[#allocation5 + $0xe8] sm:$0xff]
        %v281 = vld [vmem:[#allocation5 + $0xf0] sm:$0xff]
        %v282 = vld [vmem:[#allocation5 + $0xf8] sm:$0xff]
        %v283 = vld [vmem:[#allocation5 + $0x100] sm:$0xff]
        %v284 = vld [vmem:[#allocation5 + $0x108] sm:$0xff]
        %v285 = vld [vmem:[#allocation5 + $0x110] sm:$0xff]
        %v286 = vld [vmem:[#allocation5 + $0x118] sm:$0xff]
        %v287 = vld [vmem:[#allocation5 + $0x120] sm:$0xff]
        %v288 = vld [vmem:[#allocation5 + $0x128] sm:$0xff]
        %v289 = vld [vmem:[#allocation5 + $0x130] sm:$0xff]
        %v290 = vld [vmem:[#allocation5 + $0x138] sm:$0xff]
        %v291 = vld [vmem:[#allocation5 + $0x140] sm:$0xff]
        %v292 = vld [vmem:[#allocation5 + $0x148] sm:$0xff]
        %v293 = vld [vmem:[#allocation5 + $0x150] sm:$0xff]
        %v294 = vld [vmem:[#allocation5 + $0x158] sm:$0xff]
        %v295 = vld [vmem:[#allocation5 + $0x160] sm:$0xff]
        %v296 = vld [vmem:[#allocation5 + $0x168] sm:$0xff]
        %v297 = vld [vmem:[#allocation5 + $0x170] sm:$0xff]
        %v298 = vld [vmem:[#allocation5 + $0x178] sm:$0xff]
        %v299 = vld [vmem:[#allocation5 + $0x180] sm:$0xff]
        %v300 = vld [vmem:[#allocation5 + $0x188] sm:$0xff]
        %v301 = vld [vmem:[#allocation5 + $0x190] sm:$0xff]
        %v302 = vld [vmem:[#allocation5 + $0x198] sm:$0xff]
        %v303 = vld [vmem:[#allocation5 + $0x1a0] sm:$0xff]
        %v304 = vld [vmem:[#allocation5 + $0x1a8] sm:$0xff]
        %v305 = vld [vmem:[#allocation5 + $0x1b0] sm:$0xff]
        %v306 = vld [vmem:[#allocation5 + $0x1b8] sm:$0xff]
        %v307 = vld [vmem:[#allocation5 + $0x1c0] sm:$0xff]
        %v308 = vld [vmem:[#allocation5 + $0x1c8] sm:$0xff]
        %v309 = vld [vmem:[#allocation5 + $0x1d0] sm:$0xff]
        %v310 = vld [vmem:[#allocation5 + $0x1d8] sm:$0xff]
        %v311 = vld [vmem:[#allocation5 + $0x1e0] sm:$0xff]
        %v312 = vld [vmem:[#allocation5 + $0x1e8] sm:$0xff]
        %v313 = vld [vmem:[#allocation5 + $0x1f0] sm:$0xff]
        %v314 = vld [vmem:[#allocation5 + $0x1f8] sm:$0xff]
        %v315 = vld [vmem:[#allocation5 + $0x200] sm:$0xff]
        %v316 = vld [vmem:[#allocation5 + $0x208] sm:$0xff]
        %v317 = vld [vmem:[#allocation5 + $0x210] sm:$0xff]
        %v318 = vld [vmem:[#allocation5 + $0x218] sm:$0xff]
        %v319 = vld [vmem:[#allocation5 + $0x220] sm:$0xff]
        %v320 = vld [vmem:[#allocation5 + $0x228] sm:$0xff]
        %v321 = vld [vmem:[#allocation5 + $0x230] sm:$0xff]
        %v322 = vld [vmem:[#allocation5 + $0x238] sm:$0xff]
        %v323 = vld [vmem:[#allocation5 + $0x240] sm:$0xff]
        %v324 = vld [vmem:[#allocation5 + $0x248] sm:$0xff]
        %v325 = vld [vmem:[#allocation5 + $0x250] sm:$0xff]
        %v326 = vld [vmem:[#allocation5 + $0x258] sm:$0xff]
        %v327 = vld [vmem:[#allocation5 + $0x260] sm:$0xff]
        %v328 = vld [vmem:[#allocation5 + $0x268] sm:$0xff]
        %v329 = vld [vmem:[#allocation5 + $0x270] sm:$0xff]
        %v330 = vld [vmem:[#allocation5 + $0x278] sm:$0xff]
        %v331 = vld [vmem:[#allocation5 + $0x280] sm:$0xff]
        %v332 = vld [vmem:[#allocation5 + $0x288] sm:$0xff]
        %v333 = vld [vmem:[#allocation5 + $0x290] sm:$0xff]
        %v334 = vld [vmem:[#allocation5 + $0x298] sm:$0xff]
        %v335 = vld [vmem:[#allocation5 + $0x2a0] sm:$0xff]
        %v336 = vld [vmem:[#allocation5 + $0x2a8] sm:$0xff]
        %v337 = vld [vmem:[#allocation5 + $0x2b0] sm:$0xff]
        %v338 = vld [vmem:[#allocation5 + $0x2b8] sm:$0xff]
        %v339 = vld [vmem:[#allocation5 + $0x2c0] sm:$0xff]
        %v340 = vld [vmem:[#allocation5 + $0x2c8] sm:$0xff]
        %v341 = vld [vmem:[#allocation5 + $0x2d0] sm:$0xff]
        %v342 = vld [vmem:[#allocation5 + $0x2d8] sm:$0xff]
        %v343 = vld [vmem:[#allocation5 + $0x2e0] sm:$0xff]
        %v344 = vld [vmem:[#allocation5 + $0x2e8] sm:$0xff]
        %v345 = vld [vmem:[#allocation5 + $0x2f0] sm:$0xff]
        %v346 = vld [vmem:[#allocation5 + $0x2f8] sm:$0xff]
        %v347 = vld [vmem:[#allocation7] sm:$0x3f]
        %v348 = vunpack.c.l.bf16 %v347
        %v349 = vunpack.c.h.bf16 %v347
        %v352 = vlaneseq
        %v353 = vshrl.u32 %v352, 7
        %v354 = vsub.s32 0, %v353
        %v355 = vrot.slane %v348, %v354
        %v356 = vlaneseq
        %v357 = vshrl.u32 %v356, 7
        %v358 = vsub.s32 2, %v357
        %v359 = vrot.slane %v348, %v358
        %v360 = vlaneseq
        %v361 = vshrl.u32 %v360, 7
        %v362 = vsub.s32 4, %v361
        %v363 = vrot.slane %v348, %v362
        %v364 = vlaneseq
        %v365 = vshrl.u32 %v364, 7
        %v366 = vsub.s32 6, %v365
        %v367 = vrot.slane %v348, %v366
        %v368 = vlaneseq
        %v369 = vshrl.u32 %v368, 7
        %v370 = vsub.s32 0, %v369
        %v371 = vrot.slane %v349, %v370
        %v372 = vlaneseq
        %v373 = vshrl.u32 %v372, 7
        %v374 = vsub.s32 2, %v373
        %v375 = vrot.slane %v349, %v374
        %v382 = vlaneseq
        %v383 = vshrl.u32 %v382, 7
        %v384 = vsub.s32 0, %v383
        %v385 = vrot.slane %v355, %v384
        %v386 = vlaneseq
        %v387 = vshrl.u32 %v386, 7
        %v388 = vsub.s32 0, %v387
        %v389 = vrot.slane %v359, %v388
        %v390 = vlaneseq
        %v391 = vshrl.u32 %v390, 7
        %v392 = vsub.s32 0, %v391
        %v393 = vrot.slane %v363, %v392
        %v394 = vlaneseq
        %v395 = vshrl.u32 %v394, 7
        %v396 = vsub.s32 0, %v395
        %v397 = vrot.slane %v367, %v396
        %v398 = vlaneseq
        %v399 = vshrl.u32 %v398, 7
        %v400 = vsub.s32 0, %v399
        %v401 = vrot.slane %v371, %v400
        %v402 = vlaneseq
        %v403 = vshrl.u32 %v402, 7
        %v404 = vsub.s32 0, %v403
        %v405 = vrot.slane %v375, %v404
        %v438 = vunpack.c.l.b16 %v219
        %v439 = vunpack.c.h.b16 %v219
        %v440 = vunpack.c.l.b16 %v220
        %v441 = vunpack.c.h.b16 %v220
        %v442 = vunpack.c.l.b16 %v221
        %v443 = vunpack.c.h.b16 %v221
        %v444 = vunpack.c.l.b16 %v222
        %v445 = vunpack.c.h.b16 %v222
        %v446 = vunpack.c.l.b16 %v223
        %v447 = vunpack.c.h.b16 %v223
        %v448 = vunpack.c.l.b16 %v224
        %v449 = vunpack.c.h.b16 %v224
        %v450 = vunpack.c.l.b16 %v225
        %v451 = vunpack.c.h.b16 %v225
        %v452 = vunpack.c.l.b16 %v226
        %v453 = vunpack.c.h.b16 %v226
        %v454 = vunpack.c.l.b16 %v227
        %v455 = vunpack.c.h.b16 %v227
        %v456 = vunpack.c.l.b16 %v228
        %v457 = vunpack.c.h.b16 %v228
        %v458 = vunpack.c.l.b16 %v229
        %v459 = vunpack.c.h.b16 %v229
        %v460 = vunpack.c.l.b16 %v230
        %v461 = vunpack.c.h.b16 %v230
        %v462 = vunpack.c.l.b16 %v231
        %v463 = vunpack.c.h.b16 %v231
        %v464 = vunpack.c.l.b16 %v232
        %v465 = vunpack.c.h.b16 %v232
        %v466 = vunpack.c.l.b16 %v233
        %v467 = vunpack.c.h.b16 %v233
        %v468 = vunpack.c.l.b16 %v234
        %v469 = vunpack.c.h.b16 %v234
        %v470 = vunpack.c.l.b16 %v235
        %v471 = vunpack.c.h.b16 %v235
        %v472 = vunpack.c.l.b16 %v236
        %v473 = vunpack.c.h.b16 %v236
        %v474 = vunpack.c.l.b16 %v237
        %v475 = vunpack.c.h.b16 %v237
        %v476 = vunpack.c.l.b16 %v238
        %v477 = vunpack.c.h.b16 %v238
        %v478 = vunpack.c.l.b16 %v239
        %v479 = vunpack.c.h.b16 %v239
        %v480 = vunpack.c.l.b16 %v240
        %v481 = vunpack.c.h.b16 %v240
        %v482 = vunpack.c.l.b16 %v241
        %v483 = vunpack.c.h.b16 %v241
        %v484 = vunpack.c.l.b16 %v242
        %v485 = vunpack.c.h.b16 %v242
        %v486 = vunpack.c.l.b16 %v243
        %v487 = vunpack.c.h.b16 %v243
        %v488 = vunpack.c.l.b16 %v244
        %v489 = vunpack.c.h.b16 %v244
        %v490 = vunpack.c.l.b16 %v245
        %v491 = vunpack.c.h.b16 %v245
        %v492 = vunpack.c.l.b16 %v246
        %v493 = vunpack.c.h.b16 %v246
        %v494 = vunpack.c.l.b16 %v247
        %v495 = vunpack.c.h.b16 %v247
        %v496 = vunpack.c.l.b16 %v248
        %v497 = vunpack.c.h.b16 %v248
        %v498 = vunpack.c.l.b16 %v249
        %v499 = vunpack.c.h.b16 %v249
        %v500 = vunpack.c.l.b16 %v250
        %v501 = vunpack.c.h.b16 %v250
        %v502 = vpack.c.b16 %v440, %v438
        %v503 = vpack.c.b16 %v441, %v439
        %v504 = vpack.c.b16 %v444, %v442
        %v505 = vpack.c.b16 %v445, %v443
        %v506 = vpack.c.b16 %v448, %v446
        %v507 = vpack.c.b16 %v449, %v447
        %v508 = vpack.c.b16 %v452, %v450
        %v509 = vpack.c.b16 %v453, %v451
        %v510 = vpack.c.b16 %v456, %v454
        %v511 = vpack.c.b16 %v457, %v455
        %v512 = vpack.c.b16 %v460, %v458
        %v513 = vpack.c.b16 %v461, %v459
        %v514 = vpack.c.b16 %v464, %v462
        %v515 = vpack.c.b16 %v465, %v463
        %v516 = vpack.c.b16 %v468, %v466
        %v517 = vpack.c.b16 %v469, %v467
        %v518 = vpack.c.b16 %v472, %v470
        %v519 = vpack.c.b16 %v473, %v471
        %v520 = vpack.c.b16 %v476, %v474
        %v521 = vpack.c.b16 %v477, %v475
        %v522 = vpack.c.b16 %v480, %v478
        %v523 = vpack.c.b16 %v481, %v479
        %v524 = vpack.c.b16 %v484, %v482
        %v525 = vpack.c.b16 %v485, %v483
        %v526 = vpack.c.b16 %v488, %v486
        %v527 = vpack.c.b16 %v489, %v487
        %v528 = vpack.c.b16 %v492, %v490
        %v529 = vpack.c.b16 %v493, %v491
        %v530 = vpack.c.b16 %v496, %v494
        %v531 = vpack.c.b16 %v497, %v495
        %v532 = vpack.c.b16 %v500, %v498
        %v533 = vpack.c.b16 %v501, %v499
        %v662 = vunpack.c.l.b16 %v251
        %v663 = vunpack.c.h.b16 %v251
        %v664 = vunpack.c.l.b16 %v252
        %v665 = vunpack.c.h.b16 %v252
        %v666 = vunpack.c.l.b16 %v253
        %v667 = vunpack.c.h.b16 %v253
        %v668 = vunpack.c.l.b16 %v254
        %v669 = vunpack.c.h.b16 %v254
        %v670 = vunpack.c.l.b16 %v255
        %v671 = vunpack.c.h.b16 %v255
        %v672 = vunpack.c.l.b16 %v256
        %v673 = vunpack.c.h.b16 %v256
        %v674 = vunpack.c.l.b16 %v257
        %v675 = vunpack.c.h.b16 %v257
        %v676 = vunpack.c.l.b16 %v258
        %v677 = vunpack.c.h.b16 %v258
        %v678 = vunpack.c.l.b16 %v259
        %v679 = vunpack.c.h.b16 %v259
        %v680 = vunpack.c.l.b16 %v260
        %v681 = vunpack.c.h.b16 %v260
        %v682 = vunpack.c.l.b16 %v261
        %v683 = vunpack.c.h.b16 %v261
        %v684 = vunpack.c.l.b16 %v262
        %v685 = vunpack.c.h.b16 %v262
        %v686 = vunpack.c.l.b16 %v263
        %v687 = vunpack.c.h.b16 %v263
        %v688 = vunpack.c.l.b16 %v264
        %v689 = vunpack.c.h.b16 %v264
        %v690 = vunpack.c.l.b16 %v265
        %v691 = vunpack.c.h.b16 %v265
        %v692 = vunpack.c.l.b16 %v266
        %v693 = vunpack.c.h.b16 %v266
        %v694 = vunpack.c.l.b16 %v267
        %v695 = vunpack.c.h.b16 %v267
        %v696 = vunpack.c.l.b16 %v268
        %v697 = vunpack.c.h.b16 %v268
        %v698 = vunpack.c.l.b16 %v269
        %v699 = vunpack.c.h.b16 %v269
        %v700 = vunpack.c.l.b16 %v270
        %v701 = vunpack.c.h.b16 %v270
        %v702 = vunpack.c.l.b16 %v271
        %v703 = vunpack.c.h.b16 %v271
        %v704 = vunpack.c.l.b16 %v272
        %v705 = vunpack.c.h.b16 %v272
        %v706 = vunpack.c.l.b16 %v273
        %v707 = vunpack.c.h.b16 %v273
        %v708 = vunpack.c.l.b16 %v274
        %v709 = vunpack.c.h.b16 %v274
        %v710 = vunpack.c.l.b16 %v275
        %v711 = vunpack.c.h.b16 %v275
        %v712 = vunpack.c.l.b16 %v276
        %v713 = vunpack.c.h.b16 %v276
        %v714 = vunpack.c.l.b16 %v277
        %v715 = vunpack.c.h.b16 %v277
        %v716 = vunpack.c.l.b16 %v278
        %v717 = vunpack.c.h.b16 %v278
        %v718 = vunpack.c.l.b16 %v279
        %v719 = vunpack.c.h.b16 %v279
        %v720 = vunpack.c.l.b16 %v280
        %v721 = vunpack.c.h.b16 %v280
        %v722 = vunpack.c.l.b16 %v281
        %v723 = vunpack.c.h.b16 %v281
        %v724 = vunpack.c.l.b16 %v282
        %v725 = vunpack.c.h.b16 %v282
        %v726 = vunpack.c.l.b16 %v283
        %v727 = vunpack.c.h.b16 %v283
        %v728 = vunpack.c.l.b16 %v284
        %v729 = vunpack.c.h.b16 %v284
        %v730 = vunpack.c.l.b16 %v285
        %v731 = vunpack.c.h.b16 %v285
        %v732 = vunpack.c.l.b16 %v286
        %v733 = vunpack.c.h.b16 %v286
        %v734 = vunpack.c.l.b16 %v287
        %v735 = vunpack.c.h.b16 %v287
        %v736 = vunpack.c.l.b16 %v288
        %v737 = vunpack.c.h.b16 %v288
        %v738 = vunpack.c.l.b16 %v289
        %v739 = vunpack.c.h.b16 %v289
        %v740 = vunpack.c.l.b16 %v290
        %v741 = vunpack.c.h.b16 %v290
        %v742 = vunpack.c.l.b16 %v291
        %v743 = vunpack.c.h.b16 %v291
        %v744 = vunpack.c.l.b16 %v292
        %v745 = vunpack.c.h.b16 %v292
        %v746 = vunpack.c.l.b16 %v293
        %v747 = vunpack.c.h.b16 %v293
        %v748 = vunpack.c.l.b16 %v294
        %v749 = vunpack.c.h.b16 %v294
        %v750 = vunpack.c.l.b16 %v295
        %v751 = vunpack.c.h.b16 %v295
        %v752 = vunpack.c.l.b16 %v296
        %v753 = vunpack.c.h.b16 %v296
        %v754 = vunpack.c.l.b16 %v297
        %v755 = vunpack.c.h.b16 %v297
        %v756 = vunpack.c.l.b16 %v298
        %v757 = vunpack.c.h.b16 %v298
        %v758 = vunpack.c.l.b16 %v299
        %v759 = vunpack.c.h.b16 %v299
        %v760 = vunpack.c.l.b16 %v300
        %v761 = vunpack.c.h.b16 %v300
        %v762 = vunpack.c.l.b16 %v301
        %v763 = vunpack.c.h.b16 %v301
        %v764 = vunpack.c.l.b16 %v302
        %v765 = vunpack.c.h.b16 %v302
        %v766 = vunpack.c.l.b16 %v303
        %v767 = vunpack.c.h.b16 %v303
        %v768 = vunpack.c.l.b16 %v304
        %v769 = vunpack.c.h.b16 %v304
        %v770 = vunpack.c.l.b16 %v305
        %v771 = vunpack.c.h.b16 %v305
        %v772 = vunpack.c.l.b16 %v306
        %v773 = vunpack.c.h.b16 %v306
        %v774 = vunpack.c.l.b16 %v307
        %v775 = vunpack.c.h.b16 %v307
        %v776 = vunpack.c.l.b16 %v308
        %v777 = vunpack.c.h.b16 %v308
        %v778 = vunpack.c.l.b16 %v309
        %v779 = vunpack.c.h.b16 %v309
        %v780 = vunpack.c.l.b16 %v310
        %v781 = vunpack.c.h.b16 %v310
        %v782 = vunpack.c.l.b16 %v311
        %v783 = vunpack.c.h.b16 %v311
        %v784 = vunpack.c.l.b16 %v312
        %v785 = vunpack.c.h.b16 %v312
        %v786 = vunpack.c.l.b16 %v313
        %v787 = vunpack.c.h.b16 %v313
        %v788 = vunpack.c.l.b16 %v314
        %v789 = vunpack.c.h.b16 %v314
        %v790 = vunpack.c.l.b16 %v315
        %v791 = vunpack.c.h.b16 %v315
        %v792 = vunpack.c.l.b16 %v316
        %v793 = vunpack.c.h.b16 %v316
        %v794 = vunpack.c.l.b16 %v317
        %v795 = vunpack.c.h.b16 %v317
        %v796 = vunpack.c.l.b16 %v318
        %v797 = vunpack.c.h.b16 %v318
        %v798 = vunpack.c.l.b16 %v319
        %v799 = vunpack.c.h.b16 %v319
        %v800 = vunpack.c.l.b16 %v320
        %v801 = vunpack.c.h.b16 %v320
        %v802 = vunpack.c.l.b16 %v321
        %v803 = vunpack.c.h.b16 %v321
        %v804 = vunpack.c.l.b16 %v322
        %v805 = vunpack.c.h.b16 %v322
        %v806 = vunpack.c.l.b16 %v323
        %v807 = vunpack.c.h.b16 %v323
        %v808 = vunpack.c.l.b16 %v324
        %v809 = vunpack.c.h.b16 %v324
        %v810 = vunpack.c.l.b16 %v325
        %v811 = vunpack.c.h.b16 %v325
        %v812 = vunpack.c.l.b16 %v326
        %v813 = vunpack.c.h.b16 %v326
        %v814 = vunpack.c.l.b16 %v327
        %v815 = vunpack.c.h.b16 %v327
        %v816 = vunpack.c.l.b16 %v328
        %v817 = vunpack.c.h.b16 %v328
        %v818 = vunpack.c.l.b16 %v329
        %v819 = vunpack.c.h.b16 %v329
        %v820 = vunpack.c.l.b16 %v330
        %v821 = vunpack.c.h.b16 %v330
        %v822 = vunpack.c.l.b16 %v331
        %v823 = vunpack.c.h.b16 %v331
        %v824 = vunpack.c.l.b16 %v332
        %v825 = vunpack.c.h.b16 %v332
        %v826 = vunpack.c.l.b16 %v333
        %v827 = vunpack.c.h.b16 %v333
        %v828 = vunpack.c.l.b16 %v334
        %v829 = vunpack.c.h.b16 %v334
        %v830 = vunpack.c.l.b16 %v335
        %v831 = vunpack.c.h.b16 %v335
        %v832 = vunpack.c.l.b16 %v336
        %v833 = vunpack.c.h.b16 %v336
        %v834 = vunpack.c.l.b16 %v337
        %v835 = vunpack.c.h.b16 %v337
        %v836 = vunpack.c.l.b16 %v338
        %v837 = vunpack.c.h.b16 %v338
        %v838 = vunpack.c.l.b16 %v339
        %v839 = vunpack.c.h.b16 %v339
        %v840 = vunpack.c.l.b16 %v340
        %v841 = vunpack.c.h.b16 %v340
        %v842 = vunpack.c.l.b16 %v341
        %v843 = vunpack.c.h.b16 %v341
        %v844 = vunpack.c.l.b16 %v342
        %v845 = vunpack.c.h.b16 %v342
        %v846 = vunpack.c.l.b16 %v343
        %v847 = vunpack.c.h.b16 %v343
        %v848 = vunpack.c.l.b16 %v344
        %v849 = vunpack.c.h.b16 %v344
        %v850 = vunpack.c.l.b16 %v345
        %v851 = vunpack.c.h.b16 %v345
        %v852 = vunpack.c.l.b16 %v346
        %v853 = vunpack.c.h.b16 %v346
        %v854 = vpack.c.b16 %v668, %v662
        %v855 = vpack.c.b16 %v669, %v663
        %v856 = vpack.c.b16 %v670, %v664
        %v857 = vpack.c.b16 %v671, %v665
        %v858 = vpack.c.b16 %v672, %v666
        %v859 = vpack.c.b16 %v673, %v667
        %v860 = vpack.c.b16 %v680, %v674
        %v861 = vpack.c.b16 %v681, %v675
        %v862 = vpack.c.b16 %v682, %v676
        %v863 = vpack.c.b16 %v683, %v677
        %v864 = vpack.c.b16 %v684, %v678
        %v865 = vpack.c.b16 %v685, %v679
        %v866 = vpack.c.b16 %v692, %v686
        %v867 = vpack.c.b16 %v693, %v687
        %v868 = vpack.c.b16 %v694, %v688
        %v869 = vpack.c.b16 %v695, %v689
        %v870 = vpack.c.b16 %v696, %v690
        %v871 = vpack.c.b16 %v697, %v691
        %v872 = vpack.c.b16 %v704, %v698
        %v873 = vpack.c.b16 %v705, %v699
        %v874 = vpack.c.b16 %v706, %v700
        %v875 = vpack.c.b16 %v707, %v701
        %v876 = vpack.c.b16 %v708, %v702
        %v877 = vpack.c.b16 %v709, %v703
        %v878 = vpack.c.b16 %v716, %v710
        %v879 = vpack.c.b16 %v717, %v711
        %v880 = vpack.c.b16 %v718, %v712
        %v881 = vpack.c.b16 %v719, %v713
        %v882 = vpack.c.b16 %v720, %v714
        %v883 = vpack.c.b16 %v721, %v715
        %v884 = vpack.c.b16 %v728, %v722
        %v885 = vpack.c.b16 %v729, %v723
        %v886 = vpack.c.b16 %v730, %v724
        %v887 = vpack.c.b16 %v731, %v725
        %v888 = vpack.c.b16 %v732, %v726
        %v889 = vpack.c.b16 %v733, %v727
        %v890 = vpack.c.b16 %v740, %v734
        %v891 = vpack.c.b16 %v741, %v735
        %v892 = vpack.c.b16 %v742, %v736
        %v893 = vpack.c.b16 %v743, %v737
        %v894 = vpack.c.b16 %v744, %v738
        %v895 = vpack.c.b16 %v745, %v739
        %v896 = vpack.c.b16 %v752, %v746
        %v897 = vpack.c.b16 %v753, %v747
        %v898 = vpack.c.b16 %v754, %v748
        %v899 = vpack.c.b16 %v755, %v749
        %v900 = vpack.c.b16 %v756, %v750
        %v901 = vpack.c.b16 %v757, %v751
        %v902 = vpack.c.b16 %v764, %v758
        %v903 = vpack.c.b16 %v765, %v759
        %v904 = vpack.c.b16 %v766, %v760
        %v905 = vpack.c.b16 %v767, %v761
        %v906 = vpack.c.b16 %v768, %v762
        %v907 = vpack.c.b16 %v769, %v763
        %v908 = vpack.c.b16 %v776, %v770
        %v909 = vpack.c.b16 %v777, %v771
        %v910 = vpack.c.b16 %v778, %v772
        %v911 = vpack.c.b16 %v779, %v773
        %v912 = vpack.c.b16 %v780, %v774
        %v913 = vpack.c.b16 %v781, %v775
        %v914 = vpack.c.b16 %v788, %v782
        %v915 = vpack.c.b16 %v789, %v783
        %v916 = vpack.c.b16 %v790, %v784
        %v917 = vpack.c.b16 %v791, %v785
        %v918 = vpack.c.b16 %v792, %v786
        %v919 = vpack.c.b16 %v793, %v787
        %v920 = vpack.c.b16 %v800, %v794
        %v921 = vpack.c.b16 %v801, %v795
        %v922 = vpack.c.b16 %v802, %v796
        %v923 = vpack.c.b16 %v803, %v797
        %v924 = vpack.c.b16 %v804, %v798
        %v925 = vpack.c.b16 %v805, %v799
        %v926 = vpack.c.b16 %v812, %v806
        %v927 = vpack.c.b16 %v813, %v807
        %v928 = vpack.c.b16 %v814, %v808
        %v929 = vpack.c.b16 %v815, %v809
        %v930 = vpack.c.b16 %v816, %v810
        %v931 = vpack.c.b16 %v817, %v811
        %v932 = vpack.c.b16 %v824, %v818
        %v933 = vpack.c.b16 %v825, %v819
        %v934 = vpack.c.b16 %v826, %v820
        %v935 = vpack.c.b16 %v827, %v821
        %v936 = vpack.c.b16 %v828, %v822
        %v937 = vpack.c.b16 %v829, %v823
        %v938 = vpack.c.b16 %v836, %v830
        %v939 = vpack.c.b16 %v837, %v831
        %v940 = vpack.c.b16 %v838, %v832
        %v941 = vpack.c.b16 %v839, %v833
        %v942 = vpack.c.b16 %v840, %v834
        %v943 = vpack.c.b16 %v841, %v835
        %v944 = vpack.c.b16 %v848, %v842
        %v945 = vpack.c.b16 %v849, %v843
        %v946 = vpack.c.b16 %v850, %v844
        %v947 = vpack.c.b16 %v851, %v845
        %v948 = vpack.c.b16 %v852, %v846
        %v949 = vpack.c.b16 %v853, %v847
        %1046 = vmatprep.subr.bf16.mxu0 %v855
        %1047 = vmatpush1.bf16.msra.mxu0 %v854
        %1048 = vmatprep.subr.bf16.mxu0 %v861
        %1049 = vmatpush1.bf16.msra.mxu0 %v860
        %1050 = vmatprep.subr.bf16.mxu0 %v867
        %1051 = vmatpush1.bf16.msra.mxu0 %v866
        %1052 = vmatprep.subr.bf16.mxu0 %v873
        %1053 = vmatpush1.bf16.msra.mxu0 %v872
        %1054 = vmatprep.subr.bf16.mxu0 %v879
        %1055 = vmatpush1.bf16.msra.mxu0 %v878
        %1056 = vmatprep.subr.bf16.mxu0 %v885
        %1057 = vmatpush1.bf16.msra.mxu0 %v884
        %1058 = vmatprep.subr.bf16.mxu0 %v891
        %1059 = vmatpush1.bf16.msra.mxu0 %v890
        %1060 = vmatprep.subr.bf16.mxu0 %v897
        %1061 = vmatpush1.bf16.msra.mxu0 %v896
        %1062 = vmatprep.subr.bf16.mxu0 %v903
        %1063 = vmatpush1.bf16.msra.mxu0 %v902
        %1064 = vmatprep.subr.bf16.mxu0 %v909
        %1065 = vmatpush1.bf16.msra.mxu0 %v908
        %1066 = vmatprep.subr.bf16.mxu0 %v915
        %1067 = vmatpush1.bf16.msra.mxu0 %v914
        %1068 = vmatprep.subr.bf16.mxu0 %v921
        %1069 = vmatpush1.bf16.msra.mxu0 %v920
        %1070 = vmatprep.subr.bf16.mxu0 %v927
        %1071 = vmatpush1.bf16.msra.mxu0 %v926
        %1072 = vmatprep.subr.bf16.mxu0 %v933
        %1073 = vmatpush1.bf16.msra.mxu0 %v932
        %1074 = vmatprep.subr.bf16.mxu0 %v939
        %1075 = vmatpush1.bf16.msra.mxu0 %v938
        %1076 = vmatprep.subr.bf16.mxu0 %v945
        %1077 = vmatpush1.bf16.msra.mxu0 %v944
        %1078 = vmatprep.mubr.bf16.mxu0 %v503
        %1079 = vmatmul.mubr.bf16.gmra.mrb[0].mxu0 %v502
        %v1080 = vpop.f32.mrb[0].mxu0
        %v1081 = vadd.f32 %v385, %v1080
        %v1082 = vpop.f32.mrb[0].mxu0
        %v1083 = vadd.f32 %v389, %v1082
        %v1084 = vpop.f32.mrb[0].mxu0
        %v1085 = vadd.f32 %v385, %v1084
        %v1086 = vpop.f32.mrb[0].mxu0
        %v1087 = vadd.f32 %v389, %v1086
        %1088 = vmatprep.mubr.bf16.mxu0 %v505
        %1089 = vmatmul.mubr.bf16.gmra.mrb[0].mxu0 %v504
        %v1090 = vpop.f32.mrb[0].mxu0
        %v1091 = vadd.f32 %v385, %v1090
        %v1092 = vpop.f32.mrb[0].mxu0
        %v1093 = vadd.f32 %v389, %v1092
        %v1094 = vpop.f32.mrb[0].mxu0
        %v1095 = vadd.f32 %v385, %v1094
        %v1096 = vpop.f32.mrb[0].mxu0
        %v1097 = vadd.f32 %v389, %v1096
        %1098 = vmatprep.mubr.bf16.mxu0 %v507
        %1099 = vmatmul.mubr.bf16.gmra.mrb[0].mxu0 %v506
        %v1100 = vpop.f32.mrb[0].mxu0
        %v1101 = vadd.f32 %v385, %v1100
        %v1102 = vpop.f32.mrb[0].mxu0
        %v1103 = vadd.f32 %v389, %v1102
        %v1104 = vpop.f32.mrb[0].mxu0
        %v1105 = vadd.f32 %v385, %v1104
        %v1106 = vpop.f32.mrb[0].mxu0
        %v1107 = vadd.f32 %v389, %v1106
        %1108 = vmatprep.mubr.bf16.mxu0 %v509
        %1109 = vmatmul.mubr.bf16.gmra.mrb[0].mxu0 %v508
        %v1110 = vpop.f32.mrb[0].mxu0
        %v1111 = vadd.f32 %v385, %v1110
        %v1112 = vpop.f32.mrb[0].mxu0
        %v1113 = vadd.f32 %v389, %v1112
        %v1114 = vpop.f32.mrb[0].mxu0
        %v1115 = vadd.f32 %v385, %v1114
        %v1116 = vpop.f32.mrb[0].mxu0
        %v1117 = vadd.f32 %v389, %v1116
        %1118 = vmatprep.mubr.bf16.mxu0 %v511
        %1119 = vmatmul.mubr.bf16.gmra.mrb[0].mxu0 %v510
        %v1120 = vpop.f32.mrb[0].mxu0
        %v1121 = vadd.f32 %v385, %v1120
        %v1122 = vpop.f32.mrb[0].mxu0
        %v1123 = vadd.f32 %v389, %v1122
        %v1124 = vpop.f32.mrb[0].mxu0
        %v1125 = vadd.f32 %v385, %v1124
        %v1126 = vpop.f32.mrb[0].mxu0
        %v1127 = vadd.f32 %v389, %v1126
        %1128 = vmatprep.mubr.bf16.mxu0 %v513
        %1129 = vmatmul.mubr.bf16.gmra.mrb[0].mxu0 %v512
        %v1130 = vpop.f32.mrb[0].mxu0
        %v1131 = vadd.f32 %v385, %v1130
        %v1132 = vpop.f32.mrb[0].mxu0
        %v1133 = vadd.f32 %v389, %v1132
        %v1134 = vpop.f32.mrb[0].mxu0
        %v1135 = vadd.f32 %v385, %v1134
        %v1136 = vpop.f32.mrb[0].mxu0
        %v1137 = vadd.f32 %v389, %v1136
        %1138 = vmatprep.mubr.bf16.mxu0 %v515
        %1139 = vmatmul.mubr.bf16.gmra.mrb[0].mxu0 %v514
        %v1140 = vpop.f32.mrb[0].mxu0
        %v1141 = vadd.f32 %v385, %v1140
        %v1142 = vpop.f32.mrb[0].mxu0
        %v1143 = vadd.f32 %v389, %v1142
        %v1144 = vpop.f32.mrb[0].mxu0
        %v1145 = vadd.f32 %v385, %v1144
        %v1146 = vpop.f32.mrb[0].mxu0
        %v1147 = vadd.f32 %v389, %v1146
        %1148 = vmatprep.mubr.bf16.mxu0 %v517
        %1149 = vmatmul.mubr.bf16.gmra.mrb[0].mxu0 %v516
        %v1150 = vpop.f32.mrb[0].mxu0
        %v1151 = vadd.f32 %v385, %v1150
        %v1152 = vpop.f32.mrb[0].mxu0
        %v1153 = vadd.f32 %v389, %v1152
        %v1154 = vpop.f32.mrb[0].mxu0
        %v1155 = vadd.f32 %v385, %v1154
        %v1156 = vpop.f32.mrb[0].mxu0
        %v1157 = vadd.f32 %v389, %v1156
        %1158 = vmatprep.mubr.bf16.mxu0 %v519
        %1159 = vmatmul.mubr.bf16.gmra.mrb[0].mxu0 %v518
        %v1160 = vpop.f32.mrb[0].mxu0
        %v1161 = vadd.f32 %v385, %v1160
        %v1162 = vpop.f32.mrb[0].mxu0
        %v1163 = vadd.f32 %v389, %v1162
        %v1164 = vpop.f32.mrb[0].mxu0
        %v1165 = vadd.f32 %v385, %v1164
        %v1166 = vpop.f32.mrb[0].mxu0
        %v1167 = vadd.f32 %v389, %v1166
        %1168 = vmatprep.mubr.bf16.mxu0 %v521
        %1169 = vmatmul.mubr.bf16.gmra.mrb[0].mxu0 %v520
        %v1170 = vpop.f32.mrb[0].mxu0
        %v1171 = vadd.f32 %v385, %v1170
        %v1172 = vpop.f32.mrb[0].mxu0
        %v1173 = vadd.f32 %v389, %v1172
        %v1174 = vpop.f32.mrb[0].mxu0
        %v1175 = vadd.f32 %v385, %v1174
        %v1176 = vpop.f32.mrb[0].mxu0
        %v1177 = vadd.f32 %v389, %v1176
        %1178 = vmatprep.mubr.bf16.mxu0 %v523
        %1179 = vmatmul.mubr.bf16.gmra.mrb[0].mxu0 %v522
        %v1180 = vpop.f32.mrb[0].mxu0
        %v1181 = vadd.f32 %v385, %v1180
        %v1182 = vpop.f32.mrb[0].mxu0
        %v1183 = vadd.f32 %v389, %v1182
        %v1184 = vpop.f32.mrb[0].mxu0
        %v1185 = vadd.f32 %v385, %v1184
        %v1186 = vpop.f32.mrb[0].mxu0
        %v1187 = vadd.f32 %v389, %v1186
        %1188 = vmatprep.mubr.bf16.mxu0 %v525
        %1189 = vmatmul.mubr.bf16.gmra.mrb[0].mxu0 %v524
        %v1190 = vpop.f32.mrb[0].mxu0
        %v1191 = vadd.f32 %v385, %v1190
        %v1192 = vpop.f32.mrb[0].mxu0
        %v1193 = vadd.f32 %v389, %v1192
        %v1194 = vpop.f32.mrb[0].mxu0
        %v1195 = vadd.f32 %v385, %v1194
        %v1196 = vpop.f32.mrb[0].mxu0
        %v1197 = vadd.f32 %v389, %v1196
        %1198 = vmatprep.mubr.bf16.mxu0 %v527
        %1199 = vmatmul.mubr.bf16.gmra.mrb[0].mxu0 %v526
        %v1200 = vpop.f32.mrb[0].mxu0
        %v1201 = vadd.f32 %v385, %v1200
        %v1202 = vpop.f32.mrb[0].mxu0
        %v1203 = vadd.f32 %v389, %v1202
        %v1204 = vpop.f32.mrb[0].mxu0
        %v1205 = vadd.f32 %v385, %v1204
        %v1206 = vpop.f32.mrb[0].mxu0
        %v1207 = vadd.f32 %v389, %v1206
        %1208 = vmatprep.mubr.bf16.mxu0 %v529
        %1209 = vmatmul.mubr.bf16.gmra.mrb[0].mxu0 %v528
        %v1210 = vpop.f32.mrb[0].mxu0
        %v1211 = vadd.f32 %v385, %v1210
        %v1212 = vpop.f32.mrb[0].mxu0
        %v1213 = vadd.f32 %v389, %v1212
        %v1214 = vpop.f32.mrb[0].mxu0
        %v1215 = vadd.f32 %v385, %v1214
        %v1216 = vpop.f32.mrb[0].mxu0
        %v1217 = vadd.f32 %v389, %v1216
        %1218 = vmatprep.mubr.bf16.mxu0 %v531
        %1219 = vmatmul.mubr.bf16.gmra.mrb[0].mxu0 %v530
        %v1220 = vpop.f32.mrb[0].mxu0
        %v1221 = vadd.f32 %v385, %v1220
        %v1222 = vpop.f32.mrb[0].mxu0
        %v1223 = vadd.f32 %v389, %v1222
        %v1224 = vpop.f32.mrb[0].mxu0
        %v1225 = vadd.f32 %v385, %v1224
        %v1226 = vpop.f32.mrb[0].mxu0
        %v1227 = vadd.f32 %v389, %v1226
        %1228 = vmatprep.mubr.bf16.mxu0 %v533
        %1229 = vmatmul.mubr.bf16.gmra.mrb[0].mxu0 %v532
        %v1230 = vpop.f32.mrb[0].mxu0
        %v1231 = vadd.f32 %v385, %v1230
        %v1232 = vpop.f32.mrb[0].mxu0
        %v1233 = vadd.f32 %v389, %v1232
        %v1234 = vpop.f32.mrb[0].mxu0
        %v1235 = vadd.f32 %v385, %v1234
        %v1236 = vpop.f32.mrb[0].mxu0
        %v1237 = vadd.f32 %v389, %v1236
        %1238 = vdwg.mxu0
        %1239 = vmatprep.subr.bf16.mxu0 %v857
        %1240 = vmatpush1.bf16.msra.mxu0 %v856
        %1241 = vmatprep.subr.bf16.mxu0 %v863
        %1242 = vmatpush1.bf16.msra.mxu0 %v862
        %1243 = vmatprep.subr.bf16.mxu0 %v869
        %1244 = vmatpush1.bf16.msra.mxu0 %v868
        %1245 = vmatprep.subr.bf16.mxu0 %v875
        %1246 = vmatpush1.bf16.msra.mxu0 %v874
        %1247 = vmatprep.subr.bf16.mxu0 %v881
        %1248 = vmatpush1.bf16.msra.mxu0 %v880
        %1249 = vmatprep.subr.bf16.mxu0 %v887
        %1250 = vmatpush1.bf16.msra.mxu0 %v886
        %1251 = vmatprep.subr.bf16.mxu0 %v893
        %1252 = vmatpush1.bf16.msra.mxu0 %v892
        %1253 = vmatprep.subr.bf16.mxu0 %v899
        %1254 = vmatpush1.bf16.msra.mxu0 %v898
        %1255 = vmatprep.subr.bf16.mxu0 %v905
        %1256 = vmatpush1.bf16.msra.mxu0 %v904
        %1257 = vmatprep.subr.bf16.mxu0 %v911
        %1258 = vmatpush1.bf16.msra.mxu0 %v910
        %1259 = vmatprep.subr.bf16.mxu0 %v917
        %1260 = vmatpush1.bf16.msra.mxu0 %v916
        %1261 = vmatprep.subr.bf16.mxu0 %v923
        %1262 = vmatpush1.bf16.msra.mxu0 %v922
        %1263 = vmatprep.subr.bf16.mxu0 %v929
        %1264 = vmatpush1.bf16.msra.mxu0 %v928
        %1265 = vmatprep.subr.bf16.mxu0 %v935
        %1266 = vmatpush1.bf16.msra.mxu0 %v934
        %1267 = vmatprep.subr.bf16.mxu0 %v941
        %1268 = vmatpush1.bf16.msra.mxu0 %v940
        %1269 = vmatprep.subr.bf16.mxu0 %v947
        %1270 = vmatpush1.bf16.msra.mxu0 %v946
        %1271 = vmatprep.mubr.bf16.mxu0 %v503
        %1272 = vmatmul.mubr.bf16.gmra.mrb[0].mxu0 %v502
        %v1273 = vpop.f32.mrb[0].mxu0
        %v1274 = vadd.f32 %v393, %v1273
        %v1275 = vpop.f32.mrb[0].mxu0
        %v1276 = vadd.f32 %v397, %v1275
        %v1277 = vpop.f32.mrb[0].mxu0
        %v1278 = vadd.f32 %v393, %v1277
        %v1279 = vpop.f32.mrb[0].mxu0
        %v1280 = vadd.f32 %v397, %v1279
        %1281 = vmatprep.mubr.bf16.mxu0 %v505
        %1282 = vmatmul.mubr.bf16.gmra.mrb[0].mxu0 %v504
        %v1283 = vpop.f32.mrb[0].mxu0
        %v1284 = vadd.f32 %v393, %v1283
        %v1285 = vpop.f32.mrb[0].mxu0
        %v1286 = vadd.f32 %v397, %v1285
        %v1287 = vpop.f32.mrb[0].mxu0
        %v1288 = vadd.f32 %v393, %v1287
        %v1289 = vpop.f32.mrb[0].mxu0
        %v1290 = vadd.f32 %v397, %v1289
        %1291 = vmatprep.mubr.bf16.mxu0 %v507
        %1292 = vmatmul.mubr.bf16.gmra.mrb[0].mxu0 %v506
        %v1293 = vpop.f32.mrb[0].mxu0
        %v1294 = vadd.f32 %v393, %v1293
        %v1295 = vpop.f32.mrb[0].mxu0
        %v1296 = vadd.f32 %v397, %v1295
        %v1297 = vpop.f32.mrb[0].mxu0
        %v1298 = vadd.f32 %v393, %v1297
        %v1299 = vpop.f32.mrb[0].mxu0
        %v1300 = vadd.f32 %v397, %v1299
        %1301 = vmatprep.mubr.bf16.mxu0 %v509
        %1302 = vmatmul.mubr.bf16.gmra.mrb[0].mxu0 %v508
        %v1303 = vpop.f32.mrb[0].mxu0
        %v1304 = vadd.f32 %v393, %v1303
        %v1305 = vpop.f32.mrb[0].mxu0
        %v1306 = vadd.f32 %v397, %v1305
        %v1307 = vpop.f32.mrb[0].mxu0
        %v1308 = vadd.f32 %v393, %v1307
        %v1309 = vpop.f32.mrb[0].mxu0
        %v1310 = vadd.f32 %v397, %v1309
        %1311 = vmatprep.mubr.bf16.mxu0 %v511
        %1312 = vmatmul.mubr.bf16.gmra.mrb[0].mxu0 %v510
        %v1313 = vpop.f32.mrb[0].mxu0
        %v1314 = vadd.f32 %v393, %v1313
        %v1315 = vpop.f32.mrb[0].mxu0
        %v1316 = vadd.f32 %v397, %v1315
        %v1317 = vpop.f32.mrb[0].mxu0
        %v1318 = vadd.f32 %v393, %v1317
        %v1319 = vpop.f32.mrb[0].mxu0
        %v1320 = vadd.f32 %v397, %v1319
        %1321 = vmatprep.mubr.bf16.mxu0 %v513
        %1322 = vmatmul.mubr.bf16.gmra.mrb[0].mxu0 %v512
        %v1323 = vpop.f32.mrb[0].mxu0
        %v1324 = vadd.f32 %v393, %v1323
        %v1325 = vpop.f32.mrb[0].mxu0
        %v1326 = vadd.f32 %v397, %v1325
        %v1327 = vpop.f32.mrb[0].mxu0
        %v1328 = vadd.f32 %v393, %v1327
        %v1329 = vpop.f32.mrb[0].mxu0
        %v1330 = vadd.f32 %v397, %v1329
        %1331 = vmatprep.mubr.bf16.mxu0 %v515
        %1332 = vmatmul.mubr.bf16.gmra.mrb[0].mxu0 %v514
        %v1333 = vpop.f32.mrb[0].mxu0
        %v1334 = vadd.f32 %v393, %v1333
        %v1335 = vpop.f32.mrb[0].mxu0
        %v1336 = vadd.f32 %v397, %v1335
        %v1337 = vpop.f32.mrb[0].mxu0
        %v1338 = vadd.f32 %v393, %v1337
        %v1339 = vpop.f32.mrb[0].mxu0
        %v1340 = vadd.f32 %v397, %v1339
        %1341 = vmatprep.mubr.bf16.mxu0 %v517
        %1342 = vmatmul.mubr.bf16.gmra.mrb[0].mxu0 %v516
        %v1343 = vpop.f32.mrb[0].mxu0
        %v1344 = vadd.f32 %v393, %v1343
        %v1345 = vpop.f32.mrb[0].mxu0
        %v1346 = vadd.f32 %v397, %v1345
        %v1347 = vpop.f32.mrb[0].mxu0
        %v1348 = vadd.f32 %v393, %v1347
        %v1349 = vpop.f32.mrb[0].mxu0
        %v1350 = vadd.f32 %v397, %v1349
        %1351 = vmatprep.mubr.bf16.mxu0 %v519
        %1352 = vmatmul.mubr.bf16.gmra.mrb[0].mxu0 %v518
        %v1353 = vpop.f32.mrb[0].mxu0
        %v1354 = vadd.f32 %v393, %v1353
        %v1355 = vpop.f32.mrb[0].mxu0
        %v1356 = vadd.f32 %v397, %v1355
        %v1357 = vpop.f32.mrb[0].mxu0
        %v1358 = vadd.f32 %v393, %v1357
        %v1359 = vpop.f32.mrb[0].mxu0
        %v1360 = vadd.f32 %v397, %v1359
        %1361 = vmatprep.mubr.bf16.mxu0 %v521
        %1362 = vmatmul.mubr.bf16.gmra.mrb[0].mxu0 %v520
        %v1363 = vpop.f32.mrb[0].mxu0
        %v1364 = vadd.f32 %v393, %v1363
        %v1365 = vpop.f32.mrb[0].mxu0
        %v1366 = vadd.f32 %v397, %v1365
        %v1367 = vpop.f32.mrb[0].mxu0
        %v1368 = vadd.f32 %v393, %v1367
        %v1369 = vpop.f32.mrb[0].mxu0
        %v1370 = vadd.f32 %v397, %v1369
        %1371 = vmatprep.mubr.bf16.mxu0 %v523
        %1372 = vmatmul.mubr.bf16.gmra.mrb[0].mxu0 %v522
        %v1373 = vpop.f32.mrb[0].mxu0
        %v1374 = vadd.f32 %v393, %v1373
        %v1375 = vpop.f32.mrb[0].mxu0
        %v1376 = vadd.f32 %v397, %v1375
        %v1377 = vpop.f32.mrb[0].mxu0
        %v1378 = vadd.f32 %v393, %v1377
        %v1379 = vpop.f32.mrb[0].mxu0
        %v1380 = vadd.f32 %v397, %v1379
        %1381 = vmatprep.mubr.bf16.mxu0 %v525
        %1382 = vmatmul.mubr.bf16.gmra.mrb[0].mxu0 %v524
        %v1383 = vpop.f32.mrb[0].mxu0
        %v1384 = vadd.f32 %v393, %v1383
        %v1385 = vpop.f32.mrb[0].mxu0
        %v1386 = vadd.f32 %v397, %v1385
        %v1387 = vpop.f32.mrb[0].mxu0
        %v1388 = vadd.f32 %v393, %v1387
        %v1389 = vpop.f32.mrb[0].mxu0
        %v1390 = vadd.f32 %v397, %v1389
        %1391 = vmatprep.mubr.bf16.mxu0 %v527
        %1392 = vmatmul.mubr.bf16.gmra.mrb[0].mxu0 %v526
        %v1393 = vpop.f32.mrb[0].mxu0
        %v1394 = vadd.f32 %v393, %v1393
        %v1395 = vpop.f32.mrb[0].mxu0
        %v1396 = vadd.f32 %v397, %v1395
        %v1397 = vpop.f32.mrb[0].mxu0
        %v1398 = vadd.f32 %v393, %v1397
        %v1399 = vpop.f32.mrb[0].mxu0
        %v1400 = vadd.f32 %v397, %v1399
        %1401 = vmatprep.mubr.bf16.mxu0 %v529
        %1402 = vmatmul.mubr.bf16.gmra.mrb[0].mxu0 %v528
        %v1403 = vpop.f32.mrb[0].mxu0
        %v1404 = vadd.f32 %v393, %v1403
        %v1405 = vpop.f32.mrb[0].mxu0
        %v1406 = vadd.f32 %v397, %v1405
        %v1407 = vpop.f32.mrb[0].mxu0
        %v1408 = vadd.f32 %v393, %v1407
        %v1409 = vpop.f32.mrb[0].mxu0
        %v1410 = vadd.f32 %v397, %v1409
        %1411 = vmatprep.mubr.bf16.mxu0 %v531
        %1412 = vmatmul.mubr.bf16.gmra.mrb[0].mxu0 %v530
        %v1413 = vpop.f32.mrb[0].mxu0
        %v1414 = vadd.f32 %v393, %v1413
        %v1415 = vpop.f32.mrb[0].mxu0
        %v1416 = vadd.f32 %v397, %v1415
        %v1417 = vpop.f32.mrb[0].mxu0
        %v1418 = vadd.f32 %v393, %v1417
        %v1419 = vpop.f32.mrb[0].mxu0
        %v1420 = vadd.f32 %v397, %v1419
        %1421 = vmatprep.mubr.bf16.mxu0 %v533
        %1422 = vmatmul.mubr.bf16.gmra.mrb[0].mxu0 %v532
        %v1423 = vpop.f32.mrb[0].mxu0
        %v1424 = vadd.f32 %v393, %v1423
        %v1425 = vpop.f32.mrb[0].mxu0
        %v1426 = vadd.f32 %v397, %v1425
        %v1427 = vpop.f32.mrb[0].mxu0
        %v1428 = vadd.f32 %v393, %v1427
        %v1429 = vpop.f32.mrb[0].mxu0
        %v1430 = vadd.f32 %v397, %v1429
        %1431 = vdwg.mxu0
        %1432 = vmatprep.subr.bf16.mxu0 %v859
        %1433 = vmatpush1.bf16.msra.mxu0 %v858
        %1434 = vmatprep.subr.bf16.mxu0 %v865
        %1435 = vmatpush1.bf16.msra.mxu0 %v864
        %1436 = vmatprep.subr.bf16.mxu0 %v871
        %1437 = vmatpush1.bf16.msra.mxu0 %v870
        %1438 = vmatprep.subr.bf16.mxu0 %v877
        %1439 = vmatpush1.bf16.msra.mxu0 %v876
        %1440 = vmatprep.subr.bf16.mxu0 %v883
        %1441 = vmatpush1.bf16.msra.mxu0 %v882
        %1442 = vmatprep.subr.bf16.mxu0 %v889
        %1443 = vmatpush1.bf16.msra.mxu0 %v888
        %1444 = vmatprep.subr.bf16.mxu0 %v895
        %1445 = vmatpush1.bf16.msra.mxu0 %v894
        %1446 = vmatprep.subr.bf16.mxu0 %v901
        %1447 = vmatpush1.bf16.msra.mxu0 %v900
        %1448 = vmatprep.subr.bf16.mxu0 %v907
        %1449 = vmatpush1.bf16.msra.mxu0 %v906
        %1450 = vmatprep.subr.bf16.mxu0 %v913
        %1451 = vmatpush1.bf16.msra.mxu0 %v912
        %1452 = vmatprep.subr.bf16.mxu0 %v919
        %1453 = vmatpush1.bf16.msra.mxu0 %v918
        %1454 = vmatprep.subr.bf16.mxu0 %v925
        %1455 = vmatpush1.bf16.msra.mxu0 %v924
        %1456 = vmatprep.subr.bf16.mxu0 %v931
        %1457 = vmatpush1.bf16.msra.mxu0 %v930
        %1458 = vmatprep.subr.bf16.mxu0 %v937
        %1459 = vmatpush1.bf16.msra.mxu0 %v936
        %1460 = vmatprep.subr.bf16.mxu0 %v943
        %1461 = vmatpush1.bf16.msra.mxu0 %v942
        %1462 = vmatprep.subr.bf16.mxu0 %v949
        %1463 = vmatpush1.bf16.msra.mxu0 %v948
        %1464 = vmatprep.mubr.bf16.mxu0 %v503
        %1465 = vmatmul.mubr.bf16.gmra.mrb[0].mxu0 %v502
        %v1466 = vpop.f32.mrb[0].mxu0
        %v1467 = vadd.f32 %v401, %v1466
        %v1468 = vpop.f32.mrb[0].mxu0
        %v1469 = vadd.f32 %v405, %v1468
        %v1470 = vpop.f32.mrb[0].mxu0
        %v1471 = vadd.f32 %v401, %v1470
        %v1472 = vpop.f32.mrb[0].mxu0
        %v1473 = vadd.f32 %v405, %v1472
        %1474 = vmatprep.mubr.bf16.mxu0 %v505
        %1475 = vmatmul.mubr.bf16.gmra.mrb[0].mxu0 %v504
        %v1476 = vpop.f32.mrb[0].mxu0
        %v1477 = vadd.f32 %v401, %v1476
        %v1478 = vpop.f32.mrb[0].mxu0
        %v1479 = vadd.f32 %v405, %v1478
        %v1480 = vpop.f32.mrb[0].mxu0
        %v1481 = vadd.f32 %v401, %v1480
        %v1482 = vpop.f32.mrb[0].mxu0
        %v1483 = vadd.f32 %v405, %v1482
        %1484 = vmatprep.mubr.bf16.mxu0 %v507
        %1485 = vmatmul.mubr.bf16.gmra.mrb[0].mxu0 %v506
        %v1486 = vpop.f32.mrb[0].mxu0
        %v1487 = vadd.f32 %v401, %v1486
        %v1488 = vpop.f32.mrb[0].mxu0
        %v1489 = vadd.f32 %v405, %v1488
        %v1490 = vpop.f32.mrb[0].mxu0
        %v1491 = vadd.f32 %v401, %v1490
        %v1492 = vpop.f32.mrb[0].mxu0
        %v1493 = vadd.f32 %v405, %v1492
        %1494 = vmatprep.mubr.bf16.mxu0 %v509
        %1495 = vmatmul.mubr.bf16.gmra.mrb[0].mxu0 %v508
        %v1496 = vpop.f32.mrb[0].mxu0
        %v1497 = vadd.f32 %v401, %v1496
        %v1498 = vpop.f32.mrb[0].mxu0
        %v1499 = vadd.f32 %v405, %v1498
        %v1500 = vpop.f32.mrb[0].mxu0
        %v1501 = vadd.f32 %v401, %v1500
        %v1502 = vpop.f32.mrb[0].mxu0
        %v1503 = vadd.f32 %v405, %v1502
        %1504 = vmatprep.mubr.bf16.mxu0 %v511
        %1505 = vmatmul.mubr.bf16.gmra.mrb[0].mxu0 %v510
        %v1506 = vpop.f32.mrb[0].mxu0
        %v1507 = vadd.f32 %v401, %v1506
        %v1508 = vpop.f32.mrb[0].mxu0
        %v1509 = vadd.f32 %v405, %v1508
        %v1510 = vpop.f32.mrb[0].mxu0
        %v1511 = vadd.f32 %v401, %v1510
        %v1512 = vpop.f32.mrb[0].mxu0
        %v1513 = vadd.f32 %v405, %v1512
        %1514 = vmatprep.mubr.bf16.mxu0 %v513
        %1515 = vmatmul.mubr.bf16.gmra.mrb[0].mxu0 %v512
        %v1516 = vpop.f32.mrb[0].mxu0
        %v1517 = vadd.f32 %v401, %v1516
        %v1518 = vpop.f32.mrb[0].mxu0
        %v1519 = vadd.f32 %v405, %v1518
        %v1520 = vpop.f32.mrb[0].mxu0
        %v1521 = vadd.f32 %v401, %v1520
        %v1522 = vpop.f32.mrb[0].mxu0
        %v1523 = vadd.f32 %v405, %v1522
        %1524 = vmatprep.mubr.bf16.mxu0 %v515
        %1525 = vmatmul.mubr.bf16.gmra.mrb[0].mxu0 %v514
        %v1526 = vpop.f32.mrb[0].mxu0
        %v1527 = vadd.f32 %v401, %v1526
        %v1528 = vpop.f32.mrb[0].mxu0
        %v1529 = vadd.f32 %v405, %v1528
        %v1530 = vpop.f32.mrb[0].mxu0
        %v1531 = vadd.f32 %v401, %v1530
        %v1532 = vpop.f32.mrb[0].mxu0
        %v1533 = vadd.f32 %v405, %v1532
        %1534 = vmatprep.mubr.bf16.mxu0 %v517
        %1535 = vmatmul.mubr.bf16.gmra.mrb[0].mxu0 %v516
        %v1536 = vpop.f32.mrb[0].mxu0
        %v1537 = vadd.f32 %v401, %v1536
        %v1538 = vpop.f32.mrb[0].mxu0
        %v1539 = vadd.f32 %v405, %v1538
        %v1540 = vpop.f32.mrb[0].mxu0
        %v1541 = vadd.f32 %v401, %v1540
        %v1542 = vpop.f32.mrb[0].mxu0
        %v1543 = vadd.f32 %v405, %v1542
        %1544 = vmatprep.mubr.bf16.mxu0 %v519
        %1545 = vmatmul.mubr.bf16.gmra.mrb[0].mxu0 %v518
        %v1546 = vpop.f32.mrb[0].mxu0
        %v1547 = vadd.f32 %v401, %v1546
        %v1548 = vpop.f32.mrb[0].mxu0
        %v1549 = vadd.f32 %v405, %v1548
        %v1550 = vpop.f32.mrb[0].mxu0
        %v1551 = vadd.f32 %v401, %v1550
        %v1552 = vpop.f32.mrb[0].mxu0
        %v1553 = vadd.f32 %v405, %v1552
        %1554 = vmatprep.mubr.bf16.mxu0 %v521
        %1555 = vmatmul.mubr.bf16.gmra.mrb[0].mxu0 %v520
        %v1556 = vpop.f32.mrb[0].mxu0
        %v1557 = vadd.f32 %v401, %v1556
        %v1558 = vpop.f32.mrb[0].mxu0
        %v1559 = vadd.f32 %v405, %v1558
        %v1560 = vpop.f32.mrb[0].mxu0
        %v1561 = vadd.f32 %v401, %v1560
        %v1562 = vpop.f32.mrb[0].mxu0
        %v1563 = vadd.f32 %v405, %v1562
        %1564 = vmatprep.mubr.bf16.mxu0 %v523
        %1565 = vmatmul.mubr.bf16.gmra.mrb[0].mxu0 %v522
        %v1566 = vpop.f32.mrb[0].mxu0
        %v1567 = vadd.f32 %v401, %v1566
        %v1568 = vpop.f32.mrb[0].mxu0
        %v1569 = vadd.f32 %v405, %v1568
        %v1570 = vpop.f32.mrb[0].mxu0
        %v1571 = vadd.f32 %v401, %v1570
        %v1572 = vpop.f32.mrb[0].mxu0
        %v1573 = vadd.f32 %v405, %v1572
        %1574 = vmatprep.mubr.bf16.mxu0 %v525
        %1575 = vmatmul.mubr.bf16.gmra.mrb[0].mxu0 %v524
        %v1576 = vpop.f32.mrb[0].mxu0
        %v1577 = vadd.f32 %v401, %v1576
        %v1578 = vpop.f32.mrb[0].mxu0
        %v1579 = vadd.f32 %v405, %v1578
        %v1580 = vpop.f32.mrb[0].mxu0
        %v1581 = vadd.f32 %v401, %v1580
        %v1582 = vpop.f32.mrb[0].mxu0
        %v1583 = vadd.f32 %v405, %v1582
        %1584 = vmatprep.mubr.bf16.mxu0 %v527
        %1585 = vmatmul.mubr.bf16.gmra.mrb[0].mxu0 %v526
        %v1586 = vpop.f32.mrb[0].mxu0
        %v1587 = vadd.f32 %v401, %v1586
        %v1588 = vpop.f32.mrb[0].mxu0
        %v1589 = vadd.f32 %v405, %v1588
        %v1590 = vpop.f32.mrb[0].mxu0
        %v1591 = vadd.f32 %v401, %v1590
        %v1592 = vpop.f32.mrb[0].mxu0
        %v1593 = vadd.f32 %v405, %v1592
        %1594 = vmatprep.mubr.bf16.mxu0 %v529
        %1595 = vmatmul.mubr.bf16.gmra.mrb[0].mxu0 %v528
        %v1596 = vpop.f32.mrb[0].mxu0
        %v1597 = vadd.f32 %v401, %v1596
        %v1598 = vpop.f32.mrb[0].mxu0
        %v1599 = vadd.f32 %v405, %v1598
        %v1600 = vpop.f32.mrb[0].mxu0
        %v1601 = vadd.f32 %v401, %v1600
        %v1602 = vpop.f32.mrb[0].mxu0
        %v1603 = vadd.f32 %v405, %v1602
        %1604 = vmatprep.mubr.bf16.mxu0 %v531
        %1605 = vmatmul.mubr.bf16.gmra.mrb[0].mxu0 %v530
        %v1606 = vpop.f32.mrb[0].mxu0
        %v1607 = vadd.f32 %v401, %v1606
        %v1608 = vpop.f32.mrb[0].mxu0
        %v1609 = vadd.f32 %v405, %v1608
        %v1610 = vpop.f32.mrb[0].mxu0
        %v1611 = vadd.f32 %v401, %v1610
        %v1612 = vpop.f32.mrb[0].mxu0
        %v1613 = vadd.f32 %v405, %v1612
        %1614 = vmatprep.mubr.bf16.mxu0 %v533
        %1615 = vmatmul.mubr.bf16.gmra.mrb[0].mxu0 %v532
        %v1616 = vpop.f32.mrb[0].mxu0
        %v1617 = vadd.f32 %v401, %v1616
        %v1618 = vpop.f32.mrb[0].mxu0
        %v1619 = vadd.f32 %v405, %v1618
        %v1620 = vpop.f32.mrb[0].mxu0
        %v1621 = vadd.f32 %v401, %v1620
        %v1622 = vpop.f32.mrb[0].mxu0
        %v1623 = vadd.f32 %v405, %v1622
        %1624 = vdwg.mxu0
        %v1625 = vpack.c.bf16 %v1085, %v1081
        %v1626 = vpack.c.bf16 %v1087, %v1083
        %v1627 = vpack.c.bf16 %v1278, %v1274
        %v1628 = vpack.c.bf16 %v1280, %v1276
        %v1629 = vpack.c.bf16 %v1471, %v1467
        %v1630 = vpack.c.bf16 %v1473, %v1469
        %v1631 = vpack.c.bf16 %v1095, %v1091
        %v1632 = vpack.c.bf16 %v1097, %v1093
        %v1633 = vpack.c.bf16 %v1288, %v1284
        %v1634 = vpack.c.bf16 %v1290, %v1286
        %v1635 = vpack.c.bf16 %v1481, %v1477
        %v1636 = vpack.c.bf16 %v1483, %v1479
        %v1637 = vpack.c.bf16 %v1105, %v1101
        %v1638 = vpack.c.bf16 %v1107, %v1103
        %v1639 = vpack.c.bf16 %v1298, %v1294
        %v1640 = vpack.c.bf16 %v1300, %v1296
        %v1641 = vpack.c.bf16 %v1491, %v1487
        %v1642 = vpack.c.bf16 %v1493, %v1489
        %v1643 = vpack.c.bf16 %v1115, %v1111
        %v1644 = vpack.c.bf16 %v1117, %v1113
        %v1645 = vpack.c.bf16 %v1308, %v1304
        %v1646 = vpack.c.bf16 %v1310, %v1306
        %v1647 = vpack.c.bf16 %v1501, %v1497
        %v1648 = vpack.c.bf16 %v1503, %v1499
        %v1649 = vpack.c.bf16 %v1125, %v1121
        %v1650 = vpack.c.bf16 %v1127, %v1123
        %v1651 = vpack.c.bf16 %v1318, %v1314
        %v1652 = vpack.c.bf16 %v1320, %v1316
        %v1653 = vpack.c.bf16 %v1511, %v1507
        %v1654 = vpack.c.bf16 %v1513, %v1509
        %v1655 = vpack.c.bf16 %v1135, %v1131
        %v1656 = vpack.c.bf16 %v1137, %v1133
        %v1657 = vpack.c.bf16 %v1328, %v1324
        %v1658 = vpack.c.bf16 %v1330, %v1326
        %v1659 = vpack.c.bf16 %v1521, %v1517
        %v1660 = vpack.c.bf16 %v1523, %v1519
        %v1661 = vpack.c.bf16 %v1145, %v1141
        %v1662 = vpack.c.bf16 %v1147, %v1143
        %v1663 = vpack.c.bf16 %v1338, %v1334
        %v1664 = vpack.c.bf16 %v1340, %v1336
        %v1665 = vpack.c.bf16 %v1531, %v1527
        %v1666 = vpack.c.bf16 %v1533, %v1529
        %v1667 = vpack.c.bf16 %v1155, %v1151
        %v1668 = vpack.c.bf16 %v1157, %v1153
        %v1669 = vpack.c.bf16 %v1348, %v1344
        %v1670 = vpack.c.bf16 %v1350, %v1346
        %v1671 = vpack.c.bf16 %v1541, %v1537
        %v1672 = vpack.c.bf16 %v1543, %v1539
        %v1673 = vpack.c.bf16 %v1165, %v1161
        %v1674 = vpack.c.bf16 %v1167, %v1163
        %v1675 = vpack.c.bf16 %v1358, %v1354
        %v1676 = vpack.c.bf16 %v1360, %v1356
        %v1677 = vpack.c.bf16 %v1551, %v1547
        %v1678 = vpack.c.bf16 %v1553, %v1549
        %v1679 = vpack.c.bf16 %v1175, %v1171
        %v1680 = vpack.c.bf16 %v1177, %v1173
        %v1681 = vpack.c.bf16 %v1368, %v1364
        %v1682 = vpack.c.bf16 %v1370, %v1366
        %v1683 = vpack.c.bf16 %v1561, %v1557
        %v1684 = vpack.c.bf16 %v1563, %v1559
        %v1685 = vpack.c.bf16 %v1185, %v1181
        %v1686 = vpack.c.bf16 %v1187, %v1183
        %v1687 = vpack.c.bf16 %v1378, %v1374
        %v1688 = vpack.c.bf16 %v1380, %v1376
        %v1689 = vpack.c.bf16 %v1571, %v1567
        %v1690 = vpack.c.bf16 %v1573, %v1569
        %v1691 = vpack.c.bf16 %v1195, %v1191
        %v1692 = vpack.c.bf16 %v1197, %v1193
        %v1693 = vpack.c.bf16 %v1388, %v1384
        %v1694 = vpack.c.bf16 %v1390, %v1386
        %v1695 = vpack.c.bf16 %v1581, %v1577
        %v1696 = vpack.c.bf16 %v1583, %v1579
        %v1697 = vpack.c.bf16 %v1205, %v1201
        %v1698 = vpack.c.bf16 %v1207, %v1203
        %v1699 = vpack.c.bf16 %v1398, %v1394
        %v1700 = vpack.c.bf16 %v1400, %v1396
        %v1701 = vpack.c.bf16 %v1591, %v1587
        %v1702 = vpack.c.bf16 %v1593, %v1589
        %v1703 = vpack.c.bf16 %v1215, %v1211
        %v1704 = vpack.c.bf16 %v1217, %v1213
        %v1705 = vpack.c.bf16 %v1408, %v1404
        %v1706 = vpack.c.bf16 %v1410, %v1406
        %v1707 = vpack.c.bf16 %v1601, %v1597
        %v1708 = vpack.c.bf16 %v1603, %v1599
        %v1709 = vpack.c.bf16 %v1225, %v1221
        %v1710 = vpack.c.bf16 %v1227, %v1223
        %v1711 = vpack.c.bf16 %v1418, %v1414
        %v1712 = vpack.c.bf16 %v1420, %v1416
        %v1713 = vpack.c.bf16 %v1611, %v1607
        %v1714 = vpack.c.bf16 %v1613, %v1609
        %v1715 = vpack.c.bf16 %v1235, %v1231
        %v1716 = vpack.c.bf16 %v1237, %v1233
        %v1717 = vpack.c.bf16 %v1428, %v1424
        %v1718 = vpack.c.bf16 %v1430, %v1426
        %v1719 = vpack.c.bf16 %v1621, %v1617
        %v1720 = vpack.c.bf16 %v1623, %v1619
        %v1817 = vunpack.c.l.b16 %v1625
        %v1818 = vunpack.c.l.b16 %v1626
        %v1819 = vunpack.c.l.b16 %v1627
        %v1820 = vunpack.c.l.b16 %v1628
        %v1821 = vunpack.c.l.b16 %v1629
        %v1822 = vunpack.c.l.b16 %v1630
        %v1823 = vunpack.c.h.b16 %v1625
        %v1824 = vunpack.c.h.b16 %v1626
        %v1825 = vunpack.c.h.b16 %v1627
        %v1826 = vunpack.c.h.b16 %v1628
        %v1827 = vunpack.c.h.b16 %v1629
        %v1828 = vunpack.c.h.b16 %v1630
        %v1829 = vunpack.c.l.b16 %v1631
        %v1830 = vunpack.c.l.b16 %v1632
        %v1831 = vunpack.c.l.b16 %v1633
        %v1832 = vunpack.c.l.b16 %v1634
        %v1833 = vunpack.c.l.b16 %v1635
        %v1834 = vunpack.c.l.b16 %v1636
        %v1835 = vunpack.c.h.b16 %v1631
        %v1836 = vunpack.c.h.b16 %v1632
        %v1837 = vunpack.c.h.b16 %v1633
        %v1838 = vunpack.c.h.b16 %v1634
        %v1839 = vunpack.c.h.b16 %v1635
        %v1840 = vunpack.c.h.b16 %v1636
        %v1841 = vunpack.c.l.b16 %v1637
        %v1842 = vunpack.c.l.b16 %v1638
        %v1843 = vunpack.c.l.b16 %v1639
        %v1844 = vunpack.c.l.b16 %v1640
        %v1845 = vunpack.c.l.b16 %v1641
        %v1846 = vunpack.c.l.b16 %v1642
        %v1847 = vunpack.c.h.b16 %v1637
        %v1848 = vunpack.c.h.b16 %v1638
        %v1849 = vunpack.c.h.b16 %v1639
        %v1850 = vunpack.c.h.b16 %v1640
        %v1851 = vunpack.c.h.b16 %v1641
        %v1852 = vunpack.c.h.b16 %v1642
        %v1853 = vunpack.c.l.b16 %v1643
        %v1854 = vunpack.c.l.b16 %v1644
        %v1855 = vunpack.c.l.b16 %v1645
        %v1856 = vunpack.c.l.b16 %v1646
        %v1857 = vunpack.c.l.b16 %v1647
        %v1858 = vunpack.c.l.b16 %v1648
        %v1859 = vunpack.c.h.b16 %v1643
        %v1860 = vunpack.c.h.b16 %v1644
        %v1861 = vunpack.c.h.b16 %v1645
        %v1862 = vunpack.c.h.b16 %v1646
        %v1863 = vunpack.c.h.b16 %v1647
        %v1864 = vunpack.c.h.b16 %v1648
        %v1865 = vunpack.c.l.b16 %v1649
        %v1866 = vunpack.c.l.b16 %v1650
        %v1867 = vunpack.c.l.b16 %v1651
        %v1868 = vunpack.c.l.b16 %v1652
        %v1869 = vunpack.c.l.b16 %v1653
        %v1870 = vunpack.c.l.b16 %v1654
        %v1871 = vunpack.c.h.b16 %v1649
        %v1872 = vunpack.c.h.b16 %v1650
        %v1873 = vunpack.c.h.b16 %v1651
        %v1874 = vunpack.c.h.b16 %v1652
        %v1875 = vunpack.c.h.b16 %v1653
        %v1876 = vunpack.c.h.b16 %v1654
        %v1877 = vunpack.c.l.b16 %v1655
        %v1878 = vunpack.c.l.b16 %v1656
        %v1879 = vunpack.c.l.b16 %v1657
        %v1880 = vunpack.c.l.b16 %v1658
        %v1881 = vunpack.c.l.b16 %v1659
        %v1882 = vunpack.c.l.b16 %v1660
        %v1883 = vunpack.c.h.b16 %v1655
        %v1884 = vunpack.c.h.b16 %v1656
        %v1885 = vunpack.c.h.b16 %v1657
        %v1886 = vunpack.c.h.b16 %v1658
        %v1887 = vunpack.c.h.b16 %v1659
        %v1888 = vunpack.c.h.b16 %v1660
        %v1889 = vunpack.c.l.b16 %v1661
        %v1890 = vunpack.c.l.b16 %v1662
        %v1891 = vunpack.c.l.b16 %v1663
        %v1892 = vunpack.c.l.b16 %v1664
        %v1893 = vunpack.c.l.b16 %v1665
        %v1894 = vunpack.c.l.b16 %v1666
        %v1895 = vunpack.c.h.b16 %v1661
        %v1896 = vunpack.c.h.b16 %v1662
        %v1897 = vunpack.c.h.b16 %v1663
        %v1898 = vunpack.c.h.b16 %v1664
        %v1899 = vunpack.c.h.b16 %v1665
        %v1900 = vunpack.c.h.b16 %v1666
        %v1901 = vunpack.c.l.b16 %v1667
        %v1902 = vunpack.c.l.b16 %v1668
        %v1903 = vunpack.c.l.b16 %v1669
        %v1904 = vunpack.c.l.b16 %v1670
        %v1905 = vunpack.c.l.b16 %v1671
        %v1906 = vunpack.c.l.b16 %v1672
        %v1907 = vunpack.c.h.b16 %v1667
        %v1908 = vunpack.c.h.b16 %v1668
        %v1909 = vunpack.c.h.b16 %v1669
        %v1910 = vunpack.c.h.b16 %v1670
        %v1911 = vunpack.c.h.b16 %v1671
        %v1912 = vunpack.c.h.b16 %v1672
        %v1913 = vunpack.c.l.b16 %v1673
        %v1914 = vunpack.c.l.b16 %v1674
        %v1915 = vunpack.c.l.b16 %v1675
        %v1916 = vunpack.c.l.b16 %v1676
        %v1917 = vunpack.c.l.b16 %v1677
        %v1918 = vunpack.c.l.b16 %v1678
        %v1919 = vunpack.c.h.b16 %v1673
        %v1920 = vunpack.c.h.b16 %v1674
        %v1921 = vunpack.c.h.b16 %v1675
        %v1922 = vunpack.c.h.b16 %v1676
        %v1923 = vunpack.c.h.b16 %v1677
        %v1924 = vunpack.c.h.b16 %v1678
        %v1925 = vunpack.c.l.b16 %v1679
        %v1926 = vunpack.c.l.b16 %v1680
        %v1927 = vunpack.c.l.b16 %v1681
        %v1928 = vunpack.c.l.b16 %v1682
        %v1929 = vunpack.c.l.b16 %v1683
        %v1930 = vunpack.c.l.b16 %v1684
        %v1931 = vunpack.c.h.b16 %v1679
        %v1932 = vunpack.c.h.b16 %v1680
        %v1933 = vunpack.c.h.b16 %v1681
        %v1934 = vunpack.c.h.b16 %v1682
        %v1935 = vunpack.c.h.b16 %v1683
        %v1936 = vunpack.c.h.b16 %v1684
        %v1937 = vunpack.c.l.b16 %v1685
        %v1938 = vunpack.c.l.b16 %v1686
        %v1939 = vunpack.c.l.b16 %v1687
        %v1940 = vunpack.c.l.b16 %v1688
        %v1941 = vunpack.c.l.b16 %v1689
        %v1942 = vunpack.c.l.b16 %v1690
        %v1943 = vunpack.c.h.b16 %v1685
        %v1944 = vunpack.c.h.b16 %v1686
        %v1945 = vunpack.c.h.b16 %v1687
        %v1946 = vunpack.c.h.b16 %v1688
        %v1947 = vunpack.c.h.b16 %v1689
        %v1948 = vunpack.c.h.b16 %v1690
        %v1949 = vunpack.c.l.b16 %v1691
        %v1950 = vunpack.c.l.b16 %v1692
        %v1951 = vunpack.c.l.b16 %v1693
        %v1952 = vunpack.c.l.b16 %v1694
        %v1953 = vunpack.c.l.b16 %v1695
        %v1954 = vunpack.c.l.b16 %v1696
        %v1955 = vunpack.c.h.b16 %v1691
        %v1956 = vunpack.c.h.b16 %v1692
        %v1957 = vunpack.c.h.b16 %v1693
        %v1958 = vunpack.c.h.b16 %v1694
        %v1959 = vunpack.c.h.b16 %v1695
        %v1960 = vunpack.c.h.b16 %v1696
        %v1961 = vunpack.c.l.b16 %v1697
        %v1962 = vunpack.c.l.b16 %v1698
        %v1963 = vunpack.c.l.b16 %v1699
        %v1964 = vunpack.c.l.b16 %v1700
        %v1965 = vunpack.c.l.b16 %v1701
        %v1966 = vunpack.c.l.b16 %v1702
        %v1967 = vunpack.c.h.b16 %v1697
        %v1968 = vunpack.c.h.b16 %v1698
        %v1969 = vunpack.c.h.b16 %v1699
        %v1970 = vunpack.c.h.b16 %v1700
        %v1971 = vunpack.c.h.b16 %v1701
        %v1972 = vunpack.c.h.b16 %v1702
        %v1973 = vunpack.c.l.b16 %v1703
        %v1974 = vunpack.c.l.b16 %v1704
        %v1975 = vunpack.c.l.b16 %v1705
        %v1976 = vunpack.c.l.b16 %v1706
        %v1977 = vunpack.c.l.b16 %v1707
        %v1978 = vunpack.c.l.b16 %v1708
        %v1979 = vunpack.c.h.b16 %v1703
        %v1980 = vunpack.c.h.b16 %v1704
        %v1981 = vunpack.c.h.b16 %v1705
        %v1982 = vunpack.c.h.b16 %v1706
        %v1983 = vunpack.c.h.b16 %v1707
        %v1984 = vunpack.c.h.b16 %v1708
        %v1985 = vunpack.c.l.b16 %v1709
        %v1986 = vunpack.c.l.b16 %v1710
        %v1987 = vunpack.c.l.b16 %v1711
        %v1988 = vunpack.c.l.b16 %v1712
        %v1989 = vunpack.c.l.b16 %v1713
        %v1990 = vunpack.c.l.b16 %v1714
        %v1991 = vunpack.c.h.b16 %v1709
        %v1992 = vunpack.c.h.b16 %v1710
        %v1993 = vunpack.c.h.b16 %v1711
        %v1994 = vunpack.c.h.b16 %v1712
        %v1995 = vunpack.c.h.b16 %v1713
        %v1996 = vunpack.c.h.b16 %v1714
        %v1997 = vunpack.c.l.b16 %v1715
        %v1998 = vunpack.c.l.b16 %v1716
        %v1999 = vunpack.c.l.b16 %v1717
        %v2000 = vunpack.c.l.b16 %v1718
        %v2001 = vunpack.c.l.b16 %v1719
        %v2002 = vunpack.c.l.b16 %v1720
        %v2003 = vunpack.c.h.b16 %v1715
        %v2004 = vunpack.c.h.b16 %v1716
        %v2005 = vunpack.c.h.b16 %v1717
        %v2006 = vunpack.c.h.b16 %v1718
        %v2007 = vunpack.c.h.b16 %v1719
        %v2008 = vunpack.c.h.b16 %v1720
        %v2009 = vpack.c.b16 %v1818, %v1817
        %v2010 = vpack.c.b16 %v1820, %v1819
        %v2011 = vpack.c.b16 %v1822, %v1821
        %v2012 = vpack.c.b16 %v1824, %v1823
        %v2013 = vpack.c.b16 %v1826, %v1825
        %v2014 = vpack.c.b16 %v1828, %v1827
        %v2015 = vpack.c.b16 %v1830, %v1829
        %v2016 = vpack.c.b16 %v1832, %v1831
        %v2017 = vpack.c.b16 %v1834, %v1833
        %v2018 = vpack.c.b16 %v1836, %v1835
        %v2019 = vpack.c.b16 %v1838, %v1837
        %v2020 = vpack.c.b16 %v1840, %v1839
        %v2021 = vpack.c.b16 %v1842, %v1841
        %v2022 = vpack.c.b16 %v1844, %v1843
        %v2023 = vpack.c.b16 %v1846, %v1845
        %v2024 = vpack.c.b16 %v1848, %v1847
        %v2025 = vpack.c.b16 %v1850, %v1849
        %v2026 = vpack.c.b16 %v1852, %v1851
        %v2027 = vpack.c.b16 %v1854, %v1853
        %v2028 = vpack.c.b16 %v1856, %v1855
        %v2029 = vpack.c.b16 %v1858, %v1857
        %v2030 = vpack.c.b16 %v1860, %v1859
        %v2031 = vpack.c.b16 %v1862, %v1861
        %v2032 = vpack.c.b16 %v1864, %v1863
        %v2033 = vpack.c.b16 %v1866, %v1865
        %v2034 = vpack.c.b16 %v1868, %v1867
        %v2035 = vpack.c.b16 %v1870, %v1869
        %v2036 = vpack.c.b16 %v1872, %v1871
        %v2037 = vpack.c.b16 %v1874, %v1873
        %v2038 = vpack.c.b16 %v1876, %v1875
        %v2039 = vpack.c.b16 %v1878, %v1877
        %v2040 = vpack.c.b16 %v1880, %v1879
        %v2041 = vpack.c.b16 %v1882, %v1881
        %v2042 = vpack.c.b16 %v1884, %v1883
        %v2043 = vpack.c.b16 %v1886, %v1885
        %v2044 = vpack.c.b16 %v1888, %v1887
        %v2045 = vpack.c.b16 %v1890, %v1889
        %v2046 = vpack.c.b16 %v1892, %v1891
        %v2047 = vpack.c.b16 %v1894, %v1893
        %v2048 = vpack.c.b16 %v1896, %v1895
        %v2049 = vpack.c.b16 %v1898, %v1897
        %v2050 = vpack.c.b16 %v1900, %v1899
        %v2051 = vpack.c.b16 %v1902, %v1901
        %v2052 = vpack.c.b16 %v1904, %v1903
        %v2053 = vpack.c.b16 %v1906, %v1905
        %v2054 = vpack.c.b16 %v1908, %v1907
        %v2055 = vpack.c.b16 %v1910, %v1909
        %v2056 = vpack.c.b16 %v1912, %v1911
        %v2057 = vpack.c.b16 %v1914, %v1913
        %v2058 = vpack.c.b16 %v1916, %v1915
        %v2059 = vpack.c.b16 %v1918, %v1917
        %v2060 = vpack.c.b16 %v1920, %v1919
        %v2061 = vpack.c.b16 %v1922, %v1921
        %v2062 = vpack.c.b16 %v1924, %v1923
        %v2063 = vpack.c.b16 %v1926, %v1925
        %v2064 = vpack.c.b16 %v1928, %v1927
        %v2065 = vpack.c.b16 %v1930, %v1929
        %v2066 = vpack.c.b16 %v1932, %v1931
        %v2067 = vpack.c.b16 %v1934, %v1933
        %v2068 = vpack.c.b16 %v1936, %v1935
        %v2069 = vpack.c.b16 %v1938, %v1937
        %v2070 = vpack.c.b16 %v1940, %v1939
        %v2071 = vpack.c.b16 %v1942, %v1941
        %v2072 = vpack.c.b16 %v1944, %v1943
        %v2073 = vpack.c.b16 %v1946, %v1945
        %v2074 = vpack.c.b16 %v1948, %v1947
        %v2075 = vpack.c.b16 %v1950, %v1949
        %v2076 = vpack.c.b16 %v1952, %v1951
        %v2077 = vpack.c.b16 %v1954, %v1953
        %v2078 = vpack.c.b16 %v1956, %v1955
        %v2079 = vpack.c.b16 %v1958, %v1957
        %v2080 = vpack.c.b16 %v1960, %v1959
        %v2081 = vpack.c.b16 %v1962, %v1961
        %v2082 = vpack.c.b16 %v1964, %v1963
        %v2083 = vpack.c.b16 %v1966, %v1965
        %v2084 = vpack.c.b16 %v1968, %v1967
        %v2085 = vpack.c.b16 %v1970, %v1969
        %v2086 = vpack.c.b16 %v1972, %v1971
        %v2087 = vpack.c.b16 %v1974, %v1973
        %v2088 = vpack.c.b16 %v1976, %v1975
        %v2089 = vpack.c.b16 %v1978, %v1977
        %v2090 = vpack.c.b16 %v1980, %v1979
        %v2091 = vpack.c.b16 %v1982, %v1981
        %v2092 = vpack.c.b16 %v1984, %v1983
        %v2093 = vpack.c.b16 %v1986, %v1985
        %v2094 = vpack.c.b16 %v1988, %v1987
        %v2095 = vpack.c.b16 %v1990, %v1989
        %v2096 = vpack.c.b16 %v1992, %v1991
        %v2097 = vpack.c.b16 %v1994, %v1993
        %v2098 = vpack.c.b16 %v1996, %v1995
        %v2099 = vpack.c.b16 %v1998, %v1997
        %v2100 = vpack.c.b16 %v2000, %v1999
        %v2101 = vpack.c.b16 %v2002, %v2001
        %v2102 = vpack.c.b16 %v2004, %v2003
        %v2103 = vpack.c.b16 %v2006, %v2005
        %v2104 = vpack.c.b16 %v2008, %v2007
        %2201 = vst [vmem:[%s216] sm:$0xff] %v2009
        %2202 = vst [vmem:[%s216 + $0x8] sm:$0xff] %v2010
        %2203 = vst [vmem:[%s216 + $0x10] sm:$0xff] %v2011
        %2204 = vst [vmem:[%s216 + $0x18] sm:$0xff] %v2012
        %2205 = vst [vmem:[%s216 + $0x20] sm:$0xff] %v2013
        %2206 = vst [vmem:[%s216 + $0x28] sm:$0xff] %v2014
        %2207 = vst [vmem:[%s216 + $0x30] sm:$0xff] %v2015
        %2208 = vst [vmem:[%s216 + $0x38] sm:$0xff] %v2016
        %2209 = vst [vmem:[%s216 + $0x40] sm:$0xff] %v2017
        %2210 = vst [vmem:[%s216 + $0x48] sm:$0xff] %v2018
        %2211 = vst [vmem:[%s216 + $0x50] sm:$0xff] %v2019
        %2212 = vst [vmem:[%s216 + $0x58] sm:$0xff] %v2020
        %2213 = vst [vmem:[%s216 + $0x60] sm:$0xff] %v2021
        %2214 = vst [vmem:[%s216 + $0x68] sm:$0xff] %v2022
        %2215 = vst [vmem:[%s216 + $0x70] sm:$0xff] %v2023
        %2216 = vst [vmem:[%s216 + $0x78] sm:$0xff] %v2024
        %2217 = vst [vmem:[%s216 + $0x80] sm:$0xff] %v2025
        %2218 = vst [vmem:[%s216 + $0x88] sm:$0xff] %v2026
        %2219 = vst [vmem:[%s216 + $0x90] sm:$0xff] %v2027
        %2220 = vst [vmem:[%s216 + $0x98] sm:$0xff] %v2028
        %2221 = vst [vmem:[%s216 + $0xa0] sm:$0xff] %v2029
        %2222 = vst [vmem:[%s216 + $0xa8] sm:$0xff] %v2030
        %2223 = vst [vmem:[%s216 + $0xb0] sm:$0xff] %v2031
        %2224 = vst [vmem:[%s216 + $0xb8] sm:$0xff] %v2032
        %2225 = vst [vmem:[%s216 + $0xc0] sm:$0xff] %v2033
        %2226 = vst [vmem:[%s216 + $0xc8] sm:$0xff] %v2034
        %2227 = vst [vmem:[%s216 + $0xd0] sm:$0xff] %v2035
        %2228 = vst [vmem:[%s216 + $0xd8] sm:$0xff] %v2036
        %2229 = vst [vmem:[%s216 + $0xe0] sm:$0xff] %v2037
        %2230 = vst [vmem:[%s216 + $0xe8] sm:$0xff] %v2038
        %2231 = vst [vmem:[%s216 + $0xf0] sm:$0xff] %v2039
        %2232 = vst [vmem:[%s216 + $0xf8] sm:$0xff] %v2040
        %2233 = vst [vmem:[%s216 + $0x100] sm:$0xff] %v2041
        %2234 = vst [vmem:[%s216 + $0x108] sm:$0xff] %v2042
        %2235 = vst [vmem:[%s216 + $0x110] sm:$0xff] %v2043
        %2236 = vst [vmem:[%s216 + $0x118] sm:$0xff] %v2044
        %2237 = vst [vmem:[%s216 + $0x120] sm:$0xff] %v2045
        %2238 = vst [vmem:[%s216 + $0x128] sm:$0xff] %v2046
        %2239 = vst [vmem:[%s216 + $0x130] sm:$0xff] %v2047
        %2240 = vst [vmem:[%s216 + $0x138] sm:$0xff] %v2048
        %2241 = vst [vmem:[%s216 + $0x140] sm:$0xff] %v2049
        %2242 = vst [vmem:[%s216 + $0x148] sm:$0xff] %v2050
        %2243 = vst [vmem:[%s216 + $0x150] sm:$0xff] %v2051
        %2244 = vst [vmem:[%s216 + $0x158] sm:$0xff] %v2052
        %2245 = vst [vmem:[%s216 + $0x160] sm:$0xff] %v2053
        %2246 = vst [vmem:[%s216 + $0x168] sm:$0xff] %v2054
        %2247 = vst [vmem:[%s216 + $0x170] sm:$0xff] %v2055
        %2248 = vst [vmem:[%s216 + $0x178] sm:$0xff] %v2056
        %2249 = vst [vmem:[%s216 + $0x180] sm:$0xff] %v2057
        %2250 = vst [vmem:[%s216 + $0x188] sm:$0xff] %v2058
        %2251 = vst [vmem:[%s216 + $0x190] sm:$0xff] %v2059
        %2252 = vst [vmem:[%s216 + $0x198] sm:$0xff] %v2060
        %2253 = vst [vmem:[%s216 + $0x1a0] sm:$0xff] %v2061
        %2254 = vst [vmem:[%s216 + $0x1a8] sm:$0xff] %v2062
        %2255 = vst [vmem:[%s216 + $0x1b0] sm:$0xff] %v2063
        %2256 = vst [vmem:[%s216 + $0x1b8] sm:$0xff] %v2064
        %2257 = vst [vmem:[%s216 + $0x1c0] sm:$0xff] %v2065
        %2258 = vst [vmem:[%s216 + $0x1c8] sm:$0xff] %v2066
        %2259 = vst [vmem:[%s216 + $0x1d0] sm:$0xff] %v2067
        %2260 = vst [vmem:[%s216 + $0x1d8] sm:$0xff] %v2068
        %2261 = vst [vmem:[%s216 + $0x1e0] sm:$0xff] %v2069
        %2262 = vst [vmem:[%s216 + $0x1e8] sm:$0xff] %v2070
        %2263 = vst [vmem:[%s216 + $0x1f0] sm:$0xff] %v2071
        %2264 = vst [vmem:[%s216 + $0x1f8] sm:$0xff] %v2072
        %2265 = vst [vmem:[%s216 + $0x200] sm:$0xff] %v2073
        %2266 = vst [vmem:[%s216 + $0x208] sm:$0xff] %v2074
        %2267 = vst [vmem:[%s216 + $0x210] sm:$0xff] %v2075
        %2268 = vst [vmem:[%s216 + $0x218] sm:$0xff] %v2076
        %2269 = vst [vmem:[%s216 + $0x220] sm:$0xff] %v2077
        %2270 = vst [vmem:[%s216 + $0x228] sm:$0xff] %v2078
        %2271 = vst [vmem:[%s216 + $0x230] sm:$0xff] %v2079
        %2272 = vst [vmem:[%s216 + $0x238] sm:$0xff] %v2080
        %2273 = vst [vmem:[%s216 + $0x240] sm:$0xff] %v2081
        %2274 = vst [vmem:[%s216 + $0x248] sm:$0xff] %v2082
        %2275 = vst [vmem:[%s216 + $0x250] sm:$0xff] %v2083
        %2276 = vst [vmem:[%s216 + $0x258] sm:$0xff] %v2084
        %2277 = vst [vmem:[%s216 + $0x260] sm:$0xff] %v2085
        %2278 = vst [vmem:[%s216 + $0x268] sm:$0xff] %v2086
        %2279 = vst [vmem:[%s216 + $0x270] sm:$0xff] %v2087
        %2280 = vst [vmem:[%s216 + $0x278] sm:$0xff] %v2088
        %2281 = vst [vmem:[%s216 + $0x280] sm:$0xff] %v2089
        %2282 = vst [vmem:[%s216 + $0x288] sm:$0xff] %v2090
        %2283 = vst [vmem:[%s216 + $0x290] sm:$0xff] %v2091
        %2284 = vst [vmem:[%s216 + $0x298] sm:$0xff] %v2092
        %2285 = vst [vmem:[%s216 + $0x2a0] sm:$0xff] %v2093
        %2286 = vst [vmem:[%s216 + $0x2a8] sm:$0xff] %v2094
        %2287 = vst [vmem:[%s216 + $0x2b0] sm:$0xff] %v2095
        %2288 = vst [vmem:[%s216 + $0x2b8] sm:$0xff] %v2096
        %2289 = vst [vmem:[%s216 + $0x2c0] sm:$0xff] %v2097
        %2290 = vst [vmem:[%s216 + $0x2c8] sm:$0xff] %v2098
        %2291 = vst [vmem:[%s216 + $0x2d0] sm:$0xff] %v2099
        %2292 = vst [vmem:[%s216 + $0x2d8] sm:$0xff] %v2100
        %2293 = vst [vmem:[%s216 + $0x2e0] sm:$0xff] %v2101
        %2294 = vst [vmem:[%s216 + $0x2e8] sm:$0xff] %v2102
        %2295 = vst [vmem:[%s216 + $0x2f0] sm:$0xff] %v2103
        %2296 = vst [vmem:[%s216 + $0x2f8] sm:$0xff] %v2104
        %s2297 = sand.u32 %s97, 1
        %s2298 = scalar_lea.sflag [#allocation4], %s2297
        %s2299 = sand.u32 %s97, 1
        %s2300 = smul.addr %s2299, 768
        %s2301 = scalar_lea.vmem [#allocation8], %s2300
        // Predicated region
        $region45: #{tpu_custom_call.1} parent=31 // pred_check
          %p2302 = pneg %p107
        $region46: #{tpu_custom_call.1} parent=31 // pred_check_branch
          %2304 = sbr.rel (%p2302) target = $region48
        $region47: #{tpu_custom_call.1} parent=31 // pred_region
          %s2305 = smul.u32 32, %s21
          %s2307 = ssub.s32 12288, 12288
          %2308 = vsyncadd %s2298, %s2307
          %s2309 = smul.addr %s2305, 6
          %s2310 = smul.addr %s2309, 64
          %s2311 = scalar_lea.hbm %s3, %s2310
          %s2312 = sshll.u32 %s2301, 4
          %s2313 = int_to_ptr.vmem [resolvable:$true] %s2312
          %2318 = dma.vmem_to_hbm [thread:$0]  %s2313, 12288, %s2311, %s2298, 384, 384, 24
        $region48: #{tpu_custom_call.1} parent=31 // pred_fallthru
          _
      $region32: #{tpu_custom_call.1} parent=5 // pred_fallthru
        _
      %p2319 = scmp.le.s32.totalorder 2, %s16
      // Predicated region
      $region49: #{tpu_custom_call.1} parent=5 // pred_check
        %p2320 = pneg %p2319
      $region50: #{tpu_custom_call.1} parent=5 // pred_check_branch
        %2322 = sbr.rel (%p2320) target = $region52
      $region51: #{tpu_custom_call.1} parent=5 // pred_region
        %s2323 = ssub.s32 %s16, 2
        // Predicated region
        $region53: #{tpu_custom_call.1} parent=51 // pred_check
          %p2324 = pneg %p113
        $region54: #{tpu_custom_call.1} parent=51 // pred_check_branch
          %2326 = sbr.rel (%p2324) target = $region56
        $region55: #{tpu_custom_call.1} parent=51 // pred_region
          %s2327 = sand.u32 %s98, 1
          %s2328 = scalar_lea.sflag [#allocation4], %s2327
          %s2329 = sand.u32 %s98, 1
          %s2330 = smul.addr %s2329, 768
          %s2331 = scalar_lea.vmem [#allocation8], %s2330
          %2332 = dma.done %s2328, 12288
        $region56: #{tpu_custom_call.1} parent=51 // pred_fallthru
          _
      $region52: #{tpu_custom_call.1} parent=5 // pred_fallthru
        _
    $region6: #{tpu_custom_call.1} parent=1 // loop_footer
      %s20 = sadd.s32 1, %s16
    $region7: #{tpu_custom_call.1} parent=1 // loop_footer_branch
      %15 = sbr.rel target = $region3
    $region8: #{tpu_custom_call.1} parent=1 // loop_exit
      _
    %2333 = vsyncpa [#allocation3], 1
    %s2334 = scalar_lea.sflag [#allocation3], 1
    %2335 = vsyncpa %s2334, 1
    %2336 = vsyncpa [#allocation6], 1
    %2337 = vsyncpa [#allocation4], 1
    %s2338 = scalar_lea.sflag [#allocation4], 1
    %2339 = vsyncpa %s2338, 1

</llo_original>
